<compile_context>
chip_gen: v7x
topology: tpu7x:2x2x1
jax: 0.10.0
libtpu: 0.0.40
codegen_flags: <defaults>
</compile_context>

<pallas_src>
import math

import jax
import jax.numpy as jnp
from jax.experimental import pallas as pl
from jax.experimental.pallas import tpu as pltpu

# ---- model dims (small, consistent with the module) ----
B, S, D, H, DFF = 2, 8, 32, 4, 64
DK = D // H
EPS = 1e-6  # LayerNormalization eps (added to std, not var)


def _layernorm(x, alpha, bias):
    """Matches LayerNormalization: unbiased std, scalar alpha/bias, eps on std."""
    mean = jnp.mean(x, axis=-1, keepdims=True)
    var = jnp.sum((x - mean) ** 2, axis=-1, keepdims=True) / (x.shape[-1] - 1)
    std = jnp.sqrt(var)
    return alpha * (x - mean) / (std + EPS) + bias


def encoder_block_kernel(ln_ref, x_ref, mask_ref,
                         wqkv_ref, bqkv_ref, wo_ref, bo_ref,
                         w1_ref, b1_ref, w2_ref, b2_ref,
                         out_ref):
    # LayerNorm scalars from SMEM (scalar-path reads, no lane extract).
    a1 = ln_ref[0]
    c1 = ln_ref[1]
    a2 = ln_ref[2]
    c2 = ln_ref[3]

    # Flatten (B, S, D) -> (B*S, D) via static per-batch loads + sublane concat.
    x = jnp.concatenate([x_ref[b] for b in range(B)], axis=0)  # (B*S, D) f32

    # ---------- residual connection 0: x + SelfAttention(LN(x)) ----------
    xn = _layernorm(x, a1, c1)

    # Fused QKV: one (B*S, D) @ (D, 3D) matmul.  The 1/sqrt(d_k) scale is already
    # folded into the Q columns (and Q bias) by the wrapper.
    qkv = jnp.dot(xn, wqkv_ref[...], preferred_element_type=jnp.float32) + bqkv_ref[...]
    q = qkv[:, :D]
    k = qkv[:, D:2 * D]
    v = qkv[:, 2 * D:]

    neg_inf = jnp.float32(-1e9)
    attn_rows = []
    for b in range(B):                      # static unroll over batch
        masked = mask_ref[b] == 0           # (S, S) bool — hoisted out of head loop
        qb = q[b * S:(b + 1) * S]           # (S, D)
        kTb = k[b * S:(b + 1) * S].T        # (D, S) — one transpose per batch
        vb = v[b * S:(b + 1) * S]           # (S, D)
        acc = jnp.zeros((S, D), jnp.float32)   # heads accumulated directly into @Wo
        for h in range(H):                  # static unroll over heads
            sl = slice(h * DK, (h + 1) * DK)
            scores = jnp.dot(qb[:, sl], kTb[sl, :],
                             preferred_element_type=jnp.float32)      # (S, S)
            scores = jnp.where(masked, neg_inf, scores)
            scores = scores - jnp.max(scores, axis=-1, keepdims=True)
            p = jnp.exp(scores)
            p = p * pl.reciprocal(jnp.sum(p, axis=-1, keepdims=True), approx=False)
            head = jnp.dot(p, vb[:, sl], preferred_element_type=jnp.float32)  # (S, DK)
            # Accumulate head @ Wo[h-th row block] instead of lane-axis concat.
            acc = acc + jnp.dot(head, wo_ref[sl, :],
                                preferred_element_type=jnp.float32)   # (S, D)
        attn_rows.append(acc)

    attn_out = jnp.concatenate(attn_rows, axis=0) + bo_ref[...]        # (B*S, D)
    x = x + attn_out                        # dropout == identity (eval)

    # ---------- residual connection 1: x + FFN(LN(x)) ----------
    xn2 = _layernorm(x, a2, c2)
    h1 = jnp.maximum(
        jnp.dot(xn2, w1_ref[...], preferred_element_type=jnp.float32) + b1_ref[...],
        0.0)
    ffn = jnp.dot(h1, w2_ref[...], preferred_element_type=jnp.float32) + b2_ref[...]
    y = x + ffn                             # dropout == identity (eval)

    for b in range(B):                      # static per-batch stores
        out_ref[b] = y[b * S:(b + 1) * S].astype(out_ref.dtype)


def encoder_block(x, src_mask, params):
    """x: (B, S, D) f32, src_mask: (B, S, S) i32, params: dict of weights."""
    scale = 1.0 / math.sqrt(DK)
    # Pack Q/K/V into one (D, 3D) weight; fold the attention scale into Q.
    wqkv = jnp.concatenate(
        [params["wq"] * scale, params["wk"], params["wv"]], axis=1)    # (D, 3D)
    bqkv = jnp.concatenate(
        [params["bq"] * scale, params["bk"], params["bv"]], axis=1)    # (1, 3D)

    vmem = pl.BlockSpec(memory_space=pltpu.MemorySpace.VMEM)
    smem = pl.BlockSpec(memory_space=pltpu.MemorySpace.SMEM)

    return pl.pallas_call(
        encoder_block_kernel,
        out_shape=jax.ShapeDtypeStruct((B, S, D), jnp.float32),
        in_specs=[
            smem,                 # ln scalars [alpha1, bias1, alpha2, bias2]
            vmem,                 # x        (B, S, D)
            vmem,                 # src_mask (B, S, S)
            vmem, vmem,           # wqkv, bqkv
            vmem, vmem,           # wo, bo
            vmem, vmem,           # w1, b1
            vmem, vmem,           # w2, b2
        ],
        out_specs=vmem,
    )(params["ln"], x, src_mask, wqkv, bqkv,
      params["wo"], params["bo"],
      params["w1"], params["b1"],
      params["w2"], params["b2"])


# ---------------- pure-JAX reference (for correctness check) ----------------
def encoder_block_ref(x, src_mask, p):
    def ln(x, a, b):
        mean = jnp.mean(x, axis=-1, keepdims=True)
        var = jnp.sum((x - mean) ** 2, axis=-1, keepdims=True) / (x.shape[-1] - 1)
        return a * (x - mean) / (jnp.sqrt(var) + EPS) + b

    a1, b1_, a2, b2_ = p["ln"]
    xn = ln(x, a1, b1_)
    q = xn @ p["wq"] + p["bq"]
    k = xn @ p["wk"] + p["bk"]
    v = xn @ p["wv"] + p["bv"]
    q = q.reshape(B, S, H, DK).transpose(0, 2, 1, 3)
    k = k.reshape(B, S, H, DK).transpose(0, 2, 1, 3)
    v = v.reshape(B, S, H, DK).transpose(0, 2, 1, 3)
    scores = (q @ k.transpose(0, 1, 3, 2)) / math.sqrt(DK)
    scores = jnp.where(src_mask[:, None, :, :] == 0, -1e9, scores)
    attn = jax.nn.softmax(scores, axis=-1)
    o = (attn @ v).transpose(0, 2, 1, 3).reshape(B, S, D)
    x = x + (o @ p["wo"] + p["bo"])
    xn2 = ln(x, a2, b2_)
    ffn = jnp.maximum(xn2 @ p["w1"] + p["b1"], 0.0) @ p["w2"] + p["b2"]
    return x + ffn


if __name__ == "__main__":
    key = jax.random.PRNGKey(0)
    ks = jax.random.split(key, 13)

    def w(k, shape, fan_in):
        bound = 1.0 / math.sqrt(fan_in)
        return jax.random.uniform(k, shape, jnp.float32, -bound, bound)

    params = {
        # LayerNormalization params: alpha=1, bias=0 (as in __init__)
        "ln": jnp.array([1.0, 0.0, 1.0, 0.0], dtype=jnp.float32),
        "wq": w(ks[0], (D, D), D),   "bq": w(ks[1], (1, D), D),
        "wk": w(ks[2], (D, D), D),   "bk": w(ks[3], (1, D), D),
        "wv": w(ks[4], (D, D), D),   "bv": w(ks[5], (1, D), D),
        "wo": w(ks[6], (D, D), D),   "bo": w(ks[7], (1, D), D),
        "w1": w(ks[8], (D, DFF), D), "b1": w(ks[9], (1, DFF), D),
        "w2": w(ks[10], (DFF, D), DFF), "b2": w(ks[11], (1, D), DFF),
    }

    x = jax.random.normal(ks[12], (B, S, D), jnp.float32)

    # source padding mask: batch 0 keeps all 8 tokens, batch 1 keeps first 6
    valid = jnp.array([8, 6])
    col = jnp.arange(S)[None, None, :]                                  # (1, 1, S)
    src_mask = (col < valid[:, None, None]).astype(jnp.int32)           # (B, 1, S)
    src_mask = jnp.broadcast_to(src_mask, (B, S, S))

    out = encoder_block(x, src_mask, params)
    out = jax.block_until_ready(out)

    ref = encoder_block_ref(x, src_mask, params)
    assert out.shape == (B, S, D)
    assert jnp.allclose(out, ref, atol=1e-4, rtol=1e-4), (
        float(jnp.max(jnp.abs(out - ref))))

    print("KERNEL_OK")
</pallas_src>

<mosaic_0001>
module attributes {stable_mosaic.version = 11 : i64} {
  func.func @encoder_block_kernel(%arg0: memref<4xf32, #tpu.memory_space<smem>>, %arg1: memref<2x8x32xf32, #tpu.memory_space<vmem>>, %arg2: memref<2x8x8xi32, #tpu.memory_space<vmem>>, %arg3: memref<32x96xf32, #tpu.memory_space<vmem>>, %arg4: memref<1x96xf32, #tpu.memory_space<vmem>>, %arg5: memref<32x32xf32, #tpu.memory_space<vmem>>, %arg6: memref<1x32xf32, #tpu.memory_space<vmem>>, %arg7: memref<32x64xf32, #tpu.memory_space<vmem>>, %arg8: memref<1x64xf32, #tpu.memory_space<vmem>>, %arg9: memref<64x32xf32, #tpu.memory_space<vmem>>, %arg10: memref<1x32xf32, #tpu.memory_space<vmem>>, %arg11: memref<2x8x32xf32, #tpu.memory_space<vmem>>) attributes {dimension_semantics = [], scalar_prefetch = 0 : i64, scratch_operands = 0 : i64, tpu.core_type = #tpu.core_type<tc>} {
    %c0 = arith.constant 0 : index
    %0 = memref.load %arg0[%c0] : memref<4xf32, #tpu.memory_space<smem>>
    %c1 = arith.constant 1 : index
    %1 = memref.load %arg0[%c1] : memref<4xf32, #tpu.memory_space<smem>>
    %c2 = arith.constant 2 : index
    %2 = memref.load %arg0[%c2] : memref<4xf32, #tpu.memory_space<smem>>
    %c3 = arith.constant 3 : index
    %3 = memref.load %arg0[%c3] : memref<4xf32, #tpu.memory_space<smem>>
    %c0_0 = arith.constant 0 : index
    %c0_1 = arith.constant 0 : index
    %c0_2 = arith.constant 0 : index
    %4 = vector.load %arg1[%c0_0, %c0_1, %c0_2] : memref<2x8x32xf32, #tpu.memory_space<vmem>>, vector<1x8x32xf32>
    %5 = vector.shape_cast %4 : vector<1x8x32xf32> to vector<8x32xf32>
    %c1_3 = arith.constant 1 : index
    %c0_4 = arith.constant 0 : index
    %c0_5 = arith.constant 0 : index
    %6 = vector.load %arg1[%c1_3, %c0_4, %c0_5] : memref<2x8x32xf32, #tpu.memory_space<vmem>>, vector<1x8x32xf32>
    %7 = vector.shape_cast %6 : vector<1x8x32xf32> to vector<8x32xf32>
    %8 = tpu.concatenate %5, %7 in 0 : vector<8x32xf32>, vector<8x32xf32> -> vector<16x32xf32>
    %cst = arith.constant dense<0.000000e+00> : vector<16xf32>
    %9 = vector.multi_reduction <add>, %8, %cst [1] : vector<16x32xf32> to vector<16xf32>
    %10 = vector.shape_cast %9 : vector<16xf32> to vector<16x1xf32>
    %cst_6 = arith.constant 3.200000e+01 : f32
    %11 = vector.broadcast %cst_6 : f32 to vector<16x1xf32>
    %12 = arith.divf %10, %11 : vector<16x1xf32>
    %13 = vector.broadcast %12 : vector<16x1xf32> to vector<16x32xf32>
    %14 = arith.subf %8, %13 : vector<16x32xf32>
    %15 = arith.mulf %14, %14 : vector<16x32xf32>
    %cst_7 = arith.constant dense<0.000000e+00> : vector<16xf32>
    %16 = vector.multi_reduction <add>, %15, %cst_7 [1] : vector<16x32xf32> to vector<16xf32>
    %17 = vector.shape_cast %16 : vector<16xf32> to vector<16x1xf32>
    %cst_8 = arith.constant 3.100000e+01 : f32
    %18 = vector.broadcast %cst_8 : f32 to vector<16x1xf32>
    %19 = arith.divf %17, %18 : vector<16x1xf32>
    %20 = math.sqrt %19 : vector<16x1xf32>
    %21 = vector.broadcast %12 : vector<16x1xf32> to vector<16x32xf32>
    %22 = arith.subf %8, %21 : vector<16x32xf32>
    %23 = vector.broadcast %0 : f32 to vector<16x32xf32>
    %24 = arith.mulf %23, %22 : vector<16x32xf32>
    %cst_9 = arith.constant 9.99999997E-7 : f32
    %25 = vector.broadcast %cst_9 : f32 to vector<16x1xf32>
    %26 = arith.addf %20, %25 : vector<16x1xf32>
    %27 = vector.broadcast %26 : vector<16x1xf32> to vector<16x32xf32>
    %28 = arith.divf %24, %27 : vector<16x32xf32>
    %29 = vector.broadcast %1 : f32 to vector<16x32xf32>
    %30 = arith.addf %28, %29 : vector<16x32xf32>
    %c0_10 = arith.constant 0 : index
    %c0_11 = arith.constant 0 : index
    %31 = vector.load %arg3[%c0_10, %c0_11] : memref<32x96xf32, #tpu.memory_space<vmem>>, vector<32x96xf32>
    %cst_12 = arith.constant dense<0.000000e+00> : vector<16x96xf32>
    %32 = tpu.matmul %30, %31, %cst_12 {dimension_numbers = #tpu.dot_dimension_numbers<[1], [0], [0], [1], [0, 0, 1, 1], [], []>} : vector<16x32xf32>, vector<32x96xf32>, vector<16x96xf32> -> vector<16x96xf32>
    %c0_13 = arith.constant 0 : index
    %c0_14 = arith.constant 0 : index
    %33 = vector.load %arg4[%c0_13, %c0_14] : memref<1x96xf32, #tpu.memory_space<vmem>>, vector<1x96xf32>
    %34 = vector.broadcast %33 : vector<1x96xf32> to vector<16x96xf32>
    %35 = arith.addf %32, %34 : vector<16x96xf32>
    %36 = vector.extract_strided_slice %35 {offsets = [0, 0], sizes = [16, 32], strides = [1, 1]} : vector<16x96xf32> to vector<16x32xf32>
    %37 = vector.extract_strided_slice %35 {offsets = [0, 32], sizes = [16, 32], strides = [1, 1]} : vector<16x96xf32> to vector<16x32xf32>
    %38 = vector.extract_strided_slice %35 {offsets = [0, 64], sizes = [16, 32], strides = [1, 1]} : vector<16x96xf32> to vector<16x32xf32>
    %c0_15 = arith.constant 0 : index
    %c0_16 = arith.constant 0 : index
    %c0_17 = arith.constant 0 : index
    %39 = vector.load %arg2[%c0_15, %c0_16, %c0_17] : memref<2x8x8xi32, #tpu.memory_space<vmem>>, vector<1x8x8xi32>
    %40 = vector.shape_cast %39 : vector<1x8x8xi32> to vector<8x8xi32>
    %c0_i32 = arith.constant 0 : i32
    %41 = vector.broadcast %c0_i32 : i32 to vector<8x8xi32>
    %42 = arith.cmpi eq, %40, %41 : vector<8x8xi32>
    %43 = vector.extract_strided_slice %36 {offsets = [0, 0], sizes = [8, 32], strides = [1, 1]} : vector<16x32xf32> to vector<8x32xf32>
    %44 = vector.extract_strided_slice %37 {offsets = [0, 0], sizes = [8, 32], strides = [1, 1]} : vector<16x32xf32> to vector<8x32xf32>
    %45 = tpu.transpose %44, [1, 0] : vector<8x32xf32> -> vector<32x8xf32>
    %46 = vector.extract_strided_slice %38 {offsets = [0, 0], sizes = [8, 32], strides = [1, 1]} : vector<16x32xf32> to vector<8x32xf32>
    %cst_18 = arith.constant 0.000000e+00 : f32
    %47 = vector.broadcast %cst_18 : f32 to vector<8x32xf32>
    %48 = vector.extract_strided_slice %43 {offsets = [0, 0], sizes = [8, 8], strides = [1, 1]} : vector<8x32xf32> to vector<8x8xf32>
    %49 = vector.extract_strided_slice %45 {offsets = [0, 0], sizes = [8, 8], strides = [1, 1]} : vector<32x8xf32> to vector<8x8xf32>
    %cst_19 = arith.constant dense<0.000000e+00> : vector<8x8xf32>
    %50 = tpu.matmul %48, %49, %cst_19 {dimension_numbers = #tpu.dot_dimension_numbers<[1], [0], [0], [1], [0, 0, 1, 1], [], []>} : vector<8x8xf32>, vector<8x8xf32>, vector<8x8xf32> -> vector<8x8xf32>
    %cst_20 = arith.constant -1.000000e+09 : f32
    %51 = vector.broadcast %cst_20 : f32 to vector<8x8xf32>
    %52 = arith.select %42, %51, %50 : vector<8x8xi1>, vector<8x8xf32>
    %cst_21 = arith.constant dense<0xFF800000> : vector<8xf32>
    %53 = vector.multi_reduction <maximumf>, %52, %cst_21 [1] : vector<8x8xf32> to vector<8xf32>
    %54 = vector.shape_cast %53 : vector<8xf32> to vector<8x1xf32>
    %55 = vector.broadcast %54 : vector<8x1xf32> to vector<8x8xf32>
    %56 = arith.subf %52, %55 : vector<8x8xf32>
    %57 = math.exp %56 : vector<8x8xf32>
    %cst_22 = arith.constant dense<0.000000e+00> : vector<8xf32>
    %58 = vector.multi_reduction <add>, %57, %cst_22 [1] : vector<8x8xf32> to vector<8xf32>
    %59 = vector.shape_cast %58 : vector<8xf32> to vector<8x1xf32>
    %60 = tpu.reciprocal %59 : vector<8x1xf32> -> vector<8x1xf32>
    %61 = vector.broadcast %60 : vector<8x1xf32> to vector<8x8xf32>
    %62 = arith.mulf %57, %61 : vector<8x8xf32>
    %63 = vector.extract_strided_slice %46 {offsets = [0, 0], sizes = [8, 8], strides = [1, 1]} : vector<8x32xf32> to vector<8x8xf32>
    %cst_23 = arith.constant dense<0.000000e+00> : vector<8x8xf32>
    %64 = tpu.matmul %62, %63, %cst_23 {dimension_numbers = #tpu.dot_dimension_numbers<[1], [0], [0], [1], [0, 0, 1, 1], [], []>} : vector<8x8xf32>, vector<8x8xf32>, vector<8x8xf32> -> vector<8x8xf32>
    %c0_24 = arith.constant 0 : index
    %c0_25 = arith.constant 0 : index
    %65 = vector.load %arg5[%c0_24, %c0_25] : memref<32x32xf32, #tpu.memory_space<vmem>>, vector<8x32xf32>
    %cst_26 = arith.constant dense<0.000000e+00> : vector<8x32xf32>
    %66 = tpu.matmul %64, %65, %cst_26 {dimension_numbers = #tpu.dot_dimension_numbers<[1], [0], [0], [1], [0, 0, 1, 1], [], []>} : vector<8x8xf32>, vector<8x32xf32>, vector<8x32xf32> -> vector<8x32xf32>
    %67 = arith.addf %47, %66 : vector<8x32xf32>
    %68 = vector.extract_strided_slice %43 {offsets = [0, 8], sizes = [8, 8], strides = [1, 1]} : vector<8x32xf32> to vector<8x8xf32>
    %69 = vector.extract_strided_slice %45 {offsets = [8, 0], sizes = [8, 8], strides = [1, 1]} : vector<32x8xf32> to vector<8x8xf32>
    %cst_27 = arith.constant dense<0.000000e+00> : vector<8x8xf32>
    %70 = tpu.matmul %68, %69, %cst_27 {dimension_numbers = #tpu.dot_dimension_numbers<[1], [0], [0], [1], [0, 0, 1, 1], [], []>} : vector<8x8xf32>, vector<8x8xf32>, vector<8x8xf32> -> vector<8x8xf32>
    %cst_28 = arith.constant -1.000000e+09 : f32
    %71 = vector.broadcast %cst_28 : f32 to vector<8x8xf32>
    %72 = arith.select %42, %71, %70 : vector<8x8xi1>, vector<8x8xf32>
    %cst_29 = arith.constant dense<0xFF800000> : vector<8xf32>
    %73 = vector.multi_reduction <maximumf>, %72, %cst_29 [1] : vector<8x8xf32> to vector<8xf32>
    %74 = vector.shape_cast %73 : vector<8xf32> to vector<8x1xf32>
    %75 = vector.broadcast %74 : vector<8x1xf32> to vector<8x8xf32>
    %76 = arith.subf %72, %75 : vector<8x8xf32>
    %77 = math.exp %76 : vector<8x8xf32>
    %cst_30 = arith.constant dense<0.000000e+00> : vector<8xf32>
    %78 = vector.multi_reduction <add>, %77, %cst_30 [1] : vector<8x8xf32> to vector<8xf32>
    %79 = vector.shape_cast %78 : vector<8xf32> to vector<8x1xf32>
    %80 = tpu.reciprocal %79 : vector<8x1xf32> -> vector<8x1xf32>
    %81 = vector.broadcast %80 : vector<8x1xf32> to vector<8x8xf32>
    %82 = arith.mulf %77, %81 : vector<8x8xf32>
    %83 = vector.extract_strided_slice %46 {offsets = [0, 8], sizes = [8, 8], strides = [1, 1]} : vector<8x32xf32> to vector<8x8xf32>
    %cst_31 = arith.constant dense<0.000000e+00> : vector<8x8xf32>
    %84 = tpu.matmul %82, %83, %cst_31 {dimension_numbers = #tpu.dot_dimension_numbers<[1], [0], [0], [1], [0, 0, 1, 1], [], []>} : vector<8x8xf32>, vector<8x8xf32>, vector<8x8xf32> -> vector<8x8xf32>
    %c8 = arith.constant 8 : index
    %c0_32 = arith.constant 0 : index
    %85 = vector.load %arg5[%c8, %c0_32] : memref<32x32xf32, #tpu.memory_space<vmem>>, vector<8x32xf32>
    %cst_33 = arith.constant dense<0.000000e+00> : vector<8x32xf32>
    %86 = tpu.matmul %84, %85, %cst_33 {dimension_numbers = #tpu.dot_dimension_numbers<[1], [0], [0], [1], [0, 0, 1, 1], [], []>} : vector<8x8xf32>, vector<8x32xf32>, vector<8x32xf32> -> vector<8x32xf32>
    %87 = arith.addf %67, %86 : vector<8x32xf32>
    %88 = vector.extract_strided_slice %43 {offsets = [0, 16], sizes = [8, 8], strides = [1, 1]} : vector<8x32xf32> to vector<8x8xf32>
    %89 = vector.extract_strided_slice %45 {offsets = [16, 0], sizes = [8, 8], strides = [1, 1]} : vector<32x8xf32> to vector<8x8xf32>
    %cst_34 = arith.constant dense<0.000000e+00> : vector<8x8xf32>
    %90 = tpu.matmul %88, %89, %cst_34 {dimension_numbers = #tpu.dot_dimension_numbers<[1], [0], [0], [1], [0, 0, 1, 1], [], []>} : vector<8x8xf32>, vector<8x8xf32>, vector<8x8xf32> -> vector<8x8xf32>
    %cst_35 = arith.constant -1.000000e+09 : f32
    %91 = vector.broadcast %cst_35 : f32 to vector<8x8xf32>
    %92 = arith.select %42, %91, %90 : vector<8x8xi1>, vector<8x8xf32>
    %cst_36 = arith.constant dense<0xFF800000> : vector<8xf32>
    %93 = vector.multi_reduction <maximumf>, %92, %cst_36 [1] : vector<8x8xf32> to vector<8xf32>
    %94 = vector.shape_cast %93 : vector<8xf32> to vector<8x1xf32>
    %95 = vector.broadcast %94 : vector<8x1xf32> to vector<8x8xf32>
    %96 = arith.subf %92, %95 : vector<8x8xf32>
    %97 = math.exp %96 : vector<8x8xf32>
    %cst_37 = arith.constant dense<0.000000e+00> : vector<8xf32>
    %98 = vector.multi_reduction <add>, %97, %cst_37 [1] : vector<8x8xf32> to vector<8xf32>
    %99 = vector.shape_cast %98 : vector<8xf32> to vector<8x1xf32>
    %100 = tpu.reciprocal %99 : vector<8x1xf32> -> vector<8x1xf32>
    %101 = vector.broadcast %100 : vector<8x1xf32> to vector<8x8xf32>
    %102 = arith.mulf %97, %101 : vector<8x8xf32>
    %103 = vector.extract_strided_slice %46 {offsets = [0, 16], sizes = [8, 8], strides = [1, 1]} : vector<8x32xf32> to vector<8x8xf32>
    %cst_38 = arith.constant dense<0.000000e+00> : vector<8x8xf32>
    %104 = tpu.matmul %102, %103, %cst_38 {dimension_numbers = #tpu.dot_dimension_numbers<[1], [0], [0], [1], [0, 0, 1, 1], [], []>} : vector<8x8xf32>, vector<8x8xf32>, vector<8x8xf32> -> vector<8x8xf32>
    %c16 = arith.constant 16 : index
    %c0_39 = arith.constant 0 : index
    %105 = vector.load %arg5[%c16, %c0_39] : memref<32x32xf32, #tpu.memory_space<vmem>>, vector<8x32xf32>
    %cst_40 = arith.constant dense<0.000000e+00> : vector<8x32xf32>
    %106 = tpu.matmul %104, %105, %cst_40 {dimension_numbers = #tpu.dot_dimension_numbers<[1], [0], [0], [1], [0, 0, 1, 1], [], []>} : vector<8x8xf32>, vector<8x32xf32>, vector<8x32xf32> -> vector<8x32xf32>
    %107 = arith.addf %87, %106 : vector<8x32xf32>
    %108 = vector.extract_strided_slice %43 {offsets = [0, 24], sizes = [8, 8], strides = [1, 1]} : vector<8x32xf32> to vector<8x8xf32>
    %109 = vector.extract_strided_slice %45 {offsets = [24, 0], sizes = [8, 8], strides = [1, 1]} : vector<32x8xf32> to vector<8x8xf32>
    %cst_41 = arith.constant dense<0.000000e+00> : vector<8x8xf32>
    %110 = tpu.matmul %108, %109, %cst_41 {dimension_numbers = #tpu.dot_dimension_numbers<[1], [0], [0], [1], [0, 0, 1, 1], [], []>} : vector<8x8xf32>, vector<8x8xf32>, vector<8x8xf32> -> vector<8x8xf32>
    %cst_42 = arith.constant -1.000000e+09 : f32
    %111 = vector.broadcast %cst_42 : f32 to vector<8x8xf32>
    %112 = arith.select %42, %111, %110 : vector<8x8xi1>, vector<8x8xf32>
    %cst_43 = arith.constant dense<0xFF800000> : vector<8xf32>
    %113 = vector.multi_reduction <maximumf>, %112, %cst_43 [1] : vector<8x8xf32> to vector<8xf32>
    %114 = vector.shape_cast %113 : vector<8xf32> to vector<8x1xf32>
    %115 = vector.broadcast %114 : vector<8x1xf32> to vector<8x8xf32>
    %116 = arith.subf %112, %115 : vector<8x8xf32>
    %117 = math.exp %116 : vector<8x8xf32>
    %cst_44 = arith.constant dense<0.000000e+00> : vector<8xf32>
    %118 = vector.multi_reduction <add>, %117, %cst_44 [1] : vector<8x8xf32> to vector<8xf32>
    %119 = vector.shape_cast %118 : vector<8xf32> to vector<8x1xf32>
    %120 = tpu.reciprocal %119 : vector<8x1xf32> -> vector<8x1xf32>
    %121 = vector.broadcast %120 : vector<8x1xf32> to vector<8x8xf32>
    %122 = arith.mulf %117, %121 : vector<8x8xf32>
    %123 = vector.extract_strided_slice %46 {offsets = [0, 24], sizes = [8, 8], strides = [1, 1]} : vector<8x32xf32> to vector<8x8xf32>
    %cst_45 = arith.constant dense<0.000000e+00> : vector<8x8xf32>
    %124 = tpu.matmul %122, %123, %cst_45 {dimension_numbers = #tpu.dot_dimension_numbers<[1], [0], [0], [1], [0, 0, 1, 1], [], []>} : vector<8x8xf32>, vector<8x8xf32>, vector<8x8xf32> -> vector<8x8xf32>
    %c24 = arith.constant 24 : index
    %c0_46 = arith.constant 0 : index
    %125 = vector.load %arg5[%c24, %c0_46] : memref<32x32xf32, #tpu.memory_space<vmem>>, vector<8x32xf32>
    %cst_47 = arith.constant dense<0.000000e+00> : vector<8x32xf32>
    %126 = tpu.matmul %124, %125, %cst_47 {dimension_numbers = #tpu.dot_dimension_numbers<[1], [0], [0], [1], [0, 0, 1, 1], [], []>} : vector<8x8xf32>, vector<8x32xf32>, vector<8x32xf32> -> vector<8x32xf32>
    %127 = arith.addf %107, %126 : vector<8x32xf32>
    %c1_48 = arith.constant 1 : index
    %c0_49 = arith.constant 0 : index
    %c0_50 = arith.constant 0 : index
    %128 = vector.load %arg2[%c1_48, %c0_49, %c0_50] : memref<2x8x8xi32, #tpu.memory_space<vmem>>, vector<1x8x8xi32>
    %129 = vector.shape_cast %128 : vector<1x8x8xi32> to vector<8x8xi32>
    %c0_i32_51 = arith.constant 0 : i32
    %130 = vector.broadcast %c0_i32_51 : i32 to vector<8x8xi32>
    %131 = arith.cmpi eq, %129, %130 : vector<8x8xi32>
    %132 = vector.extract_strided_slice %36 {offsets = [8, 0], sizes = [8, 32], strides = [1, 1]} : vector<16x32xf32> to vector<8x32xf32>
    %133 = vector.extract_strided_slice %37 {offsets = [8, 0], sizes = [8, 32], strides = [1, 1]} : vector<16x32xf32> to vector<8x32xf32>
    %134 = tpu.transpose %133, [1, 0] : vector<8x32xf32> -> vector<32x8xf32>
    %135 = vector.extract_strided_slice %38 {offsets = [8, 0], sizes = [8, 32], strides = [1, 1]} : vector<16x32xf32> to vector<8x32xf32>
    %cst_52 = arith.constant 0.000000e+00 : f32
    %136 = vector.broadcast %cst_52 : f32 to vector<8x32xf32>
    %137 = vector.extract_strided_slice %132 {offsets = [0, 0], sizes = [8, 8], strides = [1, 1]} : vector<8x32xf32> to vector<8x8xf32>
    %138 = vector.extract_strided_slice %134 {offsets = [0, 0], sizes = [8, 8], strides = [1, 1]} : vector<32x8xf32> to vector<8x8xf32>
    %cst_53 = arith.constant dense<0.000000e+00> : vector<8x8xf32>
    %139 = tpu.matmul %137, %138, %cst_53 {dimension_numbers = #tpu.dot_dimension_numbers<[1], [0], [0], [1], [0, 0, 1, 1], [], []>} : vector<8x8xf32>, vector<8x8xf32>, vector<8x8xf32> -> vector<8x8xf32>
    %cst_54 = arith.constant -1.000000e+09 : f32
    %140 = vector.broadcast %cst_54 : f32 to vector<8x8xf32>
    %141 = arith.select %131, %140, %139 : vector<8x8xi1>, vector<8x8xf32>
    %cst_55 = arith.constant dense<0xFF800000> : vector<8xf32>
    %142 = vector.multi_reduction <maximumf>, %141, %cst_55 [1] : vector<8x8xf32> to vector<8xf32>
    %143 = vector.shape_cast %142 : vector<8xf32> to vector<8x1xf32>
    %144 = vector.broadcast %143 : vector<8x1xf32> to vector<8x8xf32>
    %145 = arith.subf %141, %144 : vector<8x8xf32>
    %146 = math.exp %145 : vector<8x8xf32>
    %cst_56 = arith.constant dense<0.000000e+00> : vector<8xf32>
    %147 = vector.multi_reduction <add>, %146, %cst_56 [1] : vector<8x8xf32> to vector<8xf32>
    %148 = vector.shape_cast %147 : vector<8xf32> to vector<8x1xf32>
    %149 = tpu.reciprocal %148 : vector<8x1xf32> -> vector<8x1xf32>
    %150 = vector.broadcast %149 : vector<8x1xf32> to vector<8x8xf32>
    %151 = arith.mulf %146, %150 : vector<8x8xf32>
    %152 = vector.extract_strided_slice %135 {offsets = [0, 0], sizes = [8, 8], strides = [1, 1]} : vector<8x32xf32> to vector<8x8xf32>
    %cst_57 = arith.constant dense<0.000000e+00> : vector<8x8xf32>
    %153 = tpu.matmul %151, %152, %cst_57 {dimension_numbers = #tpu.dot_dimension_numbers<[1], [0], [0], [1], [0, 0, 1, 1], [], []>} : vector<8x8xf32>, vector<8x8xf32>, vector<8x8xf32> -> vector<8x8xf32>
    %c0_58 = arith.constant 0 : index
    %c0_59 = arith.constant 0 : index
    %154 = vector.load %arg5[%c0_58, %c0_59] : memref<32x32xf32, #tpu.memory_space<vmem>>, vector<8x32xf32>
    %cst_60 = arith.constant dense<0.000000e+00> : vector<8x32xf32>
    %155 = tpu.matmul %153, %154, %cst_60 {dimension_numbers = #tpu.dot_dimension_numbers<[1], [0], [0], [1], [0, 0, 1, 1], [], []>} : vector<8x8xf32>, vector<8x32xf32>, vector<8x32xf32> -> vector<8x32xf32>
    %156 = arith.addf %136, %155 : vector<8x32xf32>
    %157 = vector.extract_strided_slice %132 {offsets = [0, 8], sizes = [8, 8], strides = [1, 1]} : vector<8x32xf32> to vector<8x8xf32>
    %158 = vector.extract_strided_slice %134 {offsets = [8, 0], sizes = [8, 8], strides = [1, 1]} : vector<32x8xf32> to vector<8x8xf32>
    %cst_61 = arith.constant dense<0.000000e+00> : vector<8x8xf32>
    %159 = tpu.matmul %157, %158, %cst_61 {dimension_numbers = #tpu.dot_dimension_numbers<[1], [0], [0], [1], [0, 0, 1, 1], [], []>} : vector<8x8xf32>, vector<8x8xf32>, vector<8x8xf32> -> vector<8x8xf32>
    %cst_62 = arith.constant -1.000000e+09 : f32
    %160 = vector.broadcast %cst_62 : f32 to vector<8x8xf32>
    %161 = arith.select %131, %160, %159 : vector<8x8xi1>, vector<8x8xf32>
    %cst_63 = arith.constant dense<0xFF800000> : vector<8xf32>
    %162 = vector.multi_reduction <maximumf>, %161, %cst_63 [1] : vector<8x8xf32> to vector<8xf32>
    %163 = vector.shape_cast %162 : vector<8xf32> to vector<8x1xf32>
    %164 = vector.broadcast %163 : vector<8x1xf32> to vector<8x8xf32>
    %165 = arith.subf %161, %164 : vector<8x8xf32>
    %166 = math.exp %165 : vector<8x8xf32>
    %cst_64 = arith.constant dense<0.000000e+00> : vector<8xf32>
    %167 = vector.multi_reduction <add>, %166, %cst_64 [1] : vector<8x8xf32> to vector<8xf32>
    %168 = vector.shape_cast %167 : vector<8xf32> to vector<8x1xf32>
    %169 = tpu.reciprocal %168 : vector<8x1xf32> -> vector<8x1xf32>
    %170 = vector.broadcast %169 : vector<8x1xf32> to vector<8x8xf32>
    %171 = arith.mulf %166, %170 : vector<8x8xf32>
    %172 = vector.extract_strided_slice %135 {offsets = [0, 8], sizes = [8, 8], strides = [1, 1]} : vector<8x32xf32> to vector<8x8xf32>
    %cst_65 = arith.constant dense<0.000000e+00> : vector<8x8xf32>
    %173 = tpu.matmul %171, %172, %cst_65 {dimension_numbers = #tpu.dot_dimension_numbers<[1], [0], [0], [1], [0, 0, 1, 1], [], []>} : vector<8x8xf32>, vector<8x8xf32>, vector<8x8xf32> -> vector<8x8xf32>
    %c8_66 = arith.constant 8 : index
    %c0_67 = arith.constant 0 : index
    %174 = vector.load %arg5[%c8_66, %c0_67] : memref<32x32xf32, #tpu.memory_space<vmem>>, vector<8x32xf32>
    %cst_68 = arith.constant dense<0.000000e+00> : vector<8x32xf32>
    %175 = tpu.matmul %173, %174, %cst_68 {dimension_numbers = #tpu.dot_dimension_numbers<[1], [0], [0], [1], [0, 0, 1, 1], [], []>} : vector<8x8xf32>, vector<8x32xf32>, vector<8x32xf32> -> vector<8x32xf32>
    %176 = arith.addf %156, %175 : vector<8x32xf32>
    %177 = vector.extract_strided_slice %132 {offsets = [0, 16], sizes = [8, 8], strides = [1, 1]} : vector<8x32xf32> to vector<8x8xf32>
    %178 = vector.extract_strided_slice %134 {offsets = [16, 0], sizes = [8, 8], strides = [1, 1]} : vector<32x8xf32> to vector<8x8xf32>
    %cst_69 = arith.constant dense<0.000000e+00> : vector<8x8xf32>
    %179 = tpu.matmul %177, %178, %cst_69 {dimension_numbers = #tpu.dot_dimension_numbers<[1], [0], [0], [1], [0, 0, 1, 1], [], []>} : vector<8x8xf32>, vector<8x8xf32>, vector<8x8xf32> -> vector<8x8xf32>
    %cst_70 = arith.constant -1.000000e+09 : f32
    %180 = vector.broadcast %cst_70 : f32 to vector<8x8xf32>
    %181 = arith.select %131, %180, %179 : vector<8x8xi1>, vector<8x8xf32>
    %cst_71 = arith.constant dense<0xFF800000> : vector<8xf32>
    %182 = vector.multi_reduction <maximumf>, %181, %cst_71 [1] : vector<8x8xf32> to vector<8xf32>
    %183 = vector.shape_cast %182 : vector<8xf32> to vector<8x1xf32>
    %184 = vector.broadcast %183 : vector<8x1xf32> to vector<8x8xf32>
    %185 = arith.subf %181, %184 : vector<8x8xf32>
    %186 = math.exp %185 : vector<8x8xf32>
    %cst_72 = arith.constant dense<0.000000e+00> : vector<8xf32>
    %187 = vector.multi_reduction <add>, %186, %cst_72 [1] : vector<8x8xf32> to vector<8xf32>
    %188 = vector.shape_cast %187 : vector<8xf32> to vector<8x1xf32>
    %189 = tpu.reciprocal %188 : vector<8x1xf32> -> vector<8x1xf32>
    %190 = vector.broadcast %189 : vector<8x1xf32> to vector<8x8xf32>
    %191 = arith.mulf %186, %190 : vector<8x8xf32>
    %192 = vector.extract_strided_slice %135 {offsets = [0, 16], sizes = [8, 8], strides = [1, 1]} : vector<8x32xf32> to vector<8x8xf32>
    %cst_73 = arith.constant dense<0.000000e+00> : vector<8x8xf32>
    %193 = tpu.matmul %191, %192, %cst_73 {dimension_numbers = #tpu.dot_dimension_numbers<[1], [0], [0], [1], [0, 0, 1, 1], [], []>} : vector<8x8xf32>, vector<8x8xf32>, vector<8x8xf32> -> vector<8x8xf32>
    %c16_74 = arith.constant 16 : index
    %c0_75 = arith.constant 0 : index
    %194 = vector.load %arg5[%c16_74, %c0_75] : memref<32x32xf32, #tpu.memory_space<vmem>>, vector<8x32xf32>
    %cst_76 = arith.constant dense<0.000000e+00> : vector<8x32xf32>
    %195 = tpu.matmul %193, %194, %cst_76 {dimension_numbers = #tpu.dot_dimension_numbers<[1], [0], [0], [1], [0, 0, 1, 1], [], []>} : vector<8x8xf32>, vector<8x32xf32>, vector<8x32xf32> -> vector<8x32xf32>
    %196 = arith.addf %176, %195 : vector<8x32xf32>
    %197 = vector.extract_strided_slice %132 {offsets = [0, 24], sizes = [8, 8], strides = [1, 1]} : vector<8x32xf32> to vector<8x8xf32>
    %198 = vector.extract_strided_slice %134 {offsets = [24, 0], sizes = [8, 8], strides = [1, 1]} : vector<32x8xf32> to vector<8x8xf32>
    %cst_77 = arith.constant dense<0.000000e+00> : vector<8x8xf32>
    %199 = tpu.matmul %197, %198, %cst_77 {dimension_numbers = #tpu.dot_dimension_numbers<[1], [0], [0], [1], [0, 0, 1, 1], [], []>} : vector<8x8xf32>, vector<8x8xf32>, vector<8x8xf32> -> vector<8x8xf32>
    %cst_78 = arith.constant -1.000000e+09 : f32
    %200 = vector.broadcast %cst_78 : f32 to vector<8x8xf32>
    %201 = arith.select %131, %200, %199 : vector<8x8xi1>, vector<8x8xf32>
    %cst_79 = arith.constant dense<0xFF800000> : vector<8xf32>
    %202 = vector.multi_reduction <maximumf>, %201, %cst_79 [1] : vector<8x8xf32> to vector<8xf32>
    %203 = vector.shape_cast %202 : vector<8xf32> to vector<8x1xf32>
    %204 = vector.broadcast %203 : vector<8x1xf32> to vector<8x8xf32>
    %205 = arith.subf %201, %204 : vector<8x8xf32>
    %206 = math.exp %205 : vector<8x8xf32>
    %cst_80 = arith.constant dense<0.000000e+00> : vector<8xf32>
    %207 = vector.multi_reduction <add>, %206, %cst_80 [1] : vector<8x8xf32> to vector<8xf32>
    %208 = vector.shape_cast %207 : vector<8xf32> to vector<8x1xf32>
    %209 = tpu.reciprocal %208 : vector<8x1xf32> -> vector<8x1xf32>
    %210 = vector.broadcast %209 : vector<8x1xf32> to vector<8x8xf32>
    %211 = arith.mulf %206, %210 : vector<8x8xf32>
    %212 = vector.extract_strided_slice %135 {offsets = [0, 24], sizes = [8, 8], strides = [1, 1]} : vector<8x32xf32> to vector<8x8xf32>
    %cst_81 = arith.constant dense<0.000000e+00> : vector<8x8xf32>
    %213 = tpu.matmul %211, %212, %cst_81 {dimension_numbers = #tpu.dot_dimension_numbers<[1], [0], [0], [1], [0, 0, 1, 1], [], []>} : vector<8x8xf32>, vector<8x8xf32>, vector<8x8xf32> -> vector<8x8xf32>
    %c24_82 = arith.constant 24 : index
    %c0_83 = arith.constant 0 : index
    %214 = vector.load %arg5[%c24_82, %c0_83] : memref<32x32xf32, #tpu.memory_space<vmem>>, vector<8x32xf32>
    %cst_84 = arith.constant dense<0.000000e+00> : vector<8x32xf32>
    %215 = tpu.matmul %213, %214, %cst_84 {dimension_numbers = #tpu.dot_dimension_numbers<[1], [0], [0], [1], [0, 0, 1, 1], [], []>} : vector<8x8xf32>, vector<8x32xf32>, vector<8x32xf32> -> vector<8x32xf32>
    %216 = arith.addf %196, %215 : vector<8x32xf32>
    %217 = tpu.concatenate %127, %216 in 0 : vector<8x32xf32>, vector<8x32xf32> -> vector<16x32xf32>
    %c0_85 = arith.constant 0 : index
    %c0_86 = arith.constant 0 : index
    %218 = vector.load %arg6[%c0_85, %c0_86] : memref<1x32xf32, #tpu.memory_space<vmem>>, vector<1x32xf32>
    %219 = vector.broadcast %218 : vector<1x32xf32> to vector<16x32xf32>
    %220 = arith.addf %217, %219 : vector<16x32xf32>
    %221 = arith.addf %8, %220 : vector<16x32xf32>
    %cst_87 = arith.constant dense<0.000000e+00> : vector<16xf32>
    %222 = vector.multi_reduction <add>, %221, %cst_87 [1] : vector<16x32xf32> to vector<16xf32>
    %223 = vector.shape_cast %222 : vector<16xf32> to vector<16x1xf32>
    %cst_88 = arith.constant 3.200000e+01 : f32
    %224 = vector.broadcast %cst_88 : f32 to vector<16x1xf32>
    %225 = arith.divf %223, %224 : vector<16x1xf32>
    %226 = vector.broadcast %225 : vector<16x1xf32> to vector<16x32xf32>
    %227 = arith.subf %221, %226 : vector<16x32xf32>
    %228 = arith.mulf %227, %227 : vector<16x32xf32>
    %cst_89 = arith.constant dense<0.000000e+00> : vector<16xf32>
    %229 = vector.multi_reduction <add>, %228, %cst_89 [1] : vector<16x32xf32> to vector<16xf32>
    %230 = vector.shape_cast %229 : vector<16xf32> to vector<16x1xf32>
    %cst_90 = arith.constant 3.100000e+01 : f32
    %231 = vector.broadcast %cst_90 : f32 to vector<16x1xf32>
    %232 = arith.divf %230, %231 : vector<16x1xf32>
    %233 = math.sqrt %232 : vector<16x1xf32>
    %234 = vector.broadcast %225 : vector<16x1xf32> to vector<16x32xf32>
    %235 = arith.subf %221, %234 : vector<16x32xf32>
    %236 = vector.broadcast %2 : f32 to vector<16x32xf32>
    %237 = arith.mulf %236, %235 : vector<16x32xf32>
    %cst_91 = arith.constant 9.99999997E-7 : f32
    %238 = vector.broadcast %cst_91 : f32 to vector<16x1xf32>
    %239 = arith.addf %233, %238 : vector<16x1xf32>
    %240 = vector.broadcast %239 : vector<16x1xf32> to vector<16x32xf32>
    %241 = arith.divf %237, %240 : vector<16x32xf32>
    %242 = vector.broadcast %3 : f32 to vector<16x32xf32>
    %243 = arith.addf %241, %242 : vector<16x32xf32>
    %c0_92 = arith.constant 0 : index
    %c0_93 = arith.constant 0 : index
    %244 = vector.load %arg7[%c0_92, %c0_93] : memref<32x64xf32, #tpu.memory_space<vmem>>, vector<32x64xf32>
    %cst_94 = arith.constant dense<0.000000e+00> : vector<16x64xf32>
    %245 = tpu.matmul %243, %244, %cst_94 {dimension_numbers = #tpu.dot_dimension_numbers<[1], [0], [0], [1], [0, 0, 1, 1], [], []>} : vector<16x32xf32>, vector<32x64xf32>, vector<16x64xf32> -> vector<16x64xf32>
    %c0_95 = arith.constant 0 : index
    %c0_96 = arith.constant 0 : index
    %246 = vector.load %arg8[%c0_95, %c0_96] : memref<1x64xf32, #tpu.memory_space<vmem>>, vector<1x64xf32>
    %247 = vector.broadcast %246 : vector<1x64xf32> to vector<16x64xf32>
    %248 = arith.addf %245, %247 : vector<16x64xf32>
    %cst_97 = arith.constant 0.000000e+00 : f32
    %249 = vector.broadcast %cst_97 : f32 to vector<16x64xf32>
    %250 = arith.maximumf %248, %249 : vector<16x64xf32>
    %c0_98 = arith.constant 0 : index
    %c0_99 = arith.constant 0 : index
    %251 = vector.load %arg9[%c0_98, %c0_99] : memref<64x32xf32, #tpu.memory_space<vmem>>, vector<64x32xf32>
    %cst_100 = arith.constant dense<0.000000e+00> : vector<16x32xf32>
    %252 = tpu.matmul %250, %251, %cst_100 {dimension_numbers = #tpu.dot_dimension_numbers<[1], [0], [0], [1], [0, 0, 1, 1], [], []>} : vector<16x64xf32>, vector<64x32xf32>, vector<16x32xf32> -> vector<16x32xf32>
    %c0_101 = arith.constant 0 : index
    %c0_102 = arith.constant 0 : index
    %253 = vector.load %arg10[%c0_101, %c0_102] : memref<1x32xf32, #tpu.memory_space<vmem>>, vector<1x32xf32>
    %254 = vector.broadcast %253 : vector<1x32xf32> to vector<16x32xf32>
    %255 = arith.addf %252, %254 : vector<16x32xf32>
    %256 = arith.addf %221, %255 : vector<16x32xf32>
    %257 = vector.extract_strided_slice %256 {offsets = [0, 0], sizes = [8, 32], strides = [1, 1]} : vector<16x32xf32> to vector<8x32xf32>
    %c0_103 = arith.constant 0 : index
    %c0_104 = arith.constant 0 : index
    %c0_105 = arith.constant 0 : index
    %258 = vector.load %arg11[%c0_103, %c0_104, %c0_105] : memref<2x8x32xf32, #tpu.memory_space<vmem>>, vector<1x8x32xf32>
    %259 = vector.shape_cast %258 : vector<1x8x32xf32> to vector<8x32xf32>
    %260 = vector.shape_cast %257 : vector<8x32xf32> to vector<1x8x32xf32>
    tpu.vector_store %arg11[%c0_103, %c0_104, %c0_105], %260 {strides = array<i32>} : memref<2x8x32xf32, #tpu.memory_space<vmem>>, vector<1x8x32xf32>,
    %261 = vector.extract_strided_slice %256 {offsets = [8, 0], sizes = [8, 32], strides = [1, 1]} : vector<16x32xf32> to vector<8x32xf32>
    %c1_106 = arith.constant 1 : index
    %c0_107 = arith.constant 0 : index
    %c0_108 = arith.constant 0 : index
    %262 = vector.load %arg11[%c1_106, %c0_107, %c0_108] : memref<2x8x32xf32, #tpu.memory_space<vmem>>, vector<1x8x32xf32>
    %263 = vector.shape_cast %262 : vector<1x8x32xf32> to vector<8x32xf32>
    %264 = vector.shape_cast %261 : vector<8x32xf32> to vector<1x8x32xf32>
    tpu.vector_store %arg11[%c1_106, %c0_107, %c0_108], %264 {strides = array<i32>} : memref<2x8x32xf32, #tpu.memory_space<vmem>>, vector<1x8x32xf32>,
    return
  }
}

</mosaic_0001>

<llo_original>
// kernel: tpu_custom_call.1
$region0: #{tpu_custom_call.1}
  #allocation0 [shape = 'u32[]', space=smem, size = 0x4, offset = 0x4, fixed_abs, tag = 'smem constant byte address 0x4 - core index']
  #allocation1 [shape = 'u32[144,128]{1,0:T(1,128)}', space=vmem, size = 0x12000, scoped, tag = 'internal scratch']
  %s0 = inlined_call_operand.hbm [shape: f32[4], index: 0, kind: input, shape index: {}]
  %s1 = inlined_call_operand.hbm [shape: f32[2,8,32], index: 1, kind: input, shape index: {}]
  %s2 = inlined_call_operand.hbm [shape: s32[2,8,8], index: 2, kind: input, shape index: {}]
  %s3 = inlined_call_operand.vmem [shape: f32[32,96], index: 3, kind: input, shape index: {}]
  %s4 = inlined_call_operand.vmem [shape: f32[1,96], index: 4, kind: input, shape index: {}]
  %s5 = inlined_call_operand.vmem [shape: f32[32,32], index: 5, kind: input, shape index: {}]
  %s6 = inlined_call_operand.vmem [shape: f32[1,32], index: 6, kind: input, shape index: {}]
  %s7 = inlined_call_operand.vmem [shape: f32[32,64], index: 7, kind: input, shape index: {}]
  %s8 = inlined_call_operand.hbm [shape: f32[1,64], index: 8, kind: input, shape index: {}]
  %s9 = inlined_call_operand.vmem [shape: f32[64,32], index: 9, kind: input, shape index: {}]
  %s10 = inlined_call_operand.vmem [shape: f32[1,32], index: 10, kind: input, shape index: {}]
  %s11 = inlined_call_operand.hbm [shape: f32[2,8,32], index: 11, kind: output, shape index: {}]
  %s12 = sld [smem:[#allocation0]]
  $region70: #{tpu_custom_call.1} parent=0
    _
  %s14 = ssub.s32 1, %s12
  %s15 = scalar_select 0, %s14, %s12
  $region1: #{tpu_custom_call.1} parent=0
    #allocation2 [shape = 'u8[512]{0}', space=smem, size = 0x200, scoped, tag = 'input window, operand 0, single buffered']
    #allocation3 [shape = 's32[1]{0}', space=sflag, size = 0x4, scoped, tag = 'scoped memory for tpu_custom_call.1']
    #allocation4 [shape = 's32[1]{0}', space=sflag, size = 0x4, scoped, tag = 'scoped memory for tpu_custom_call.1']
    #allocation5 [shape = 's32[1]{0}', space=sflag, size = 0x4, scoped, tag = 'scoped memory for tpu_custom_call.1']
    #allocation6 [shape = 'u8[8192]{0}', space=vmem, size = 0x2000, scoped, tag = 'input window, operand 1, single buffered']
    #allocation7 [shape = 'u8[8192]{0}', space=vmem, size = 0x2000, scoped, tag = 'input window, operand 2, single buffered']
    #allocation8 [shape = 's32[1]{0}', space=sflag, size = 0x4, scoped, tag = 'scoped memory for tpu_custom_call.1']
    #allocation9 [shape = 'u8[512]{0}', space=vmem, size = 0x400, scoped, tag = 'input window, operand 8, single buffered']
    #allocation10 [shape = 'u8[8192]{0}', space=vmem, size = 0x2000, scoped, tag = 'output window, operand 0, single buffered']
    %16 = vsyncpa [#allocation5], 0
    %17 = vsyncpa [#allocation3], 0
    %18 = vsyncpa [#allocation8], 0
    %19 = vsyncpa [#allocation4], 0
    // Predicated region
    $region2: #{tpu_custom_call.1} parent=1 // pred_check
      _
    $region3: #{tpu_custom_call.1} parent=1 // pred_check_branch
      %21 = sbr.rel (0) target = $region5
    $region4: #{tpu_custom_call.1} parent=1 // pred_region
      %s23 = ssub.s32 16, 16
      %24 = vsyncadd [#allocation5], %s23
      %27 = dma.hbm_to_smem %s0, 16, [#allocation2], [#allocation5]
    $region5: #{tpu_custom_call.1} parent=1 // pred_fallthru
      _
    // Predicated region
    $region6: #{tpu_custom_call.1} parent=1 // pred_check
      _
    $region7: #{tpu_custom_call.1} parent=1 // pred_check_branch
      %29 = sbr.rel (0) target = $region9
    $region8: #{tpu_custom_call.1} parent=1 // pred_region
      %s31 = ssub.s32 256, 256
      %32 = vsyncadd [#allocation3], %s31
      %s33 = sshll.u32 [#allocation6], 4
      %s34 = int_to_ptr.vmem [resolvable:$true] %s33
      %39 = dma.hbm_to_vmem [thread:$0]  %s1, 256, %s34, [#allocation3], 128, 128, 8
    $region9: #{tpu_custom_call.1} parent=1 // pred_fallthru
      _
    // Predicated region
    $region10: #{tpu_custom_call.1} parent=1 // pred_check
      _
    $region11: #{tpu_custom_call.1} parent=1 // pred_check_branch
      %41 = sbr.rel (0) target = $region13
    $region12: #{tpu_custom_call.1} parent=1 // pred_region
      %s43 = ssub.s32 256, 256
      %44 = vsyncadd [#allocation8], %s43
      %s45 = sshll.u32 [#allocation7], 4
      %s46 = int_to_ptr.vmem [resolvable:$true] %s45
      %51 = dma.hbm_to_vmem [thread:$0]  %s2, 256, %s46, [#allocation8], 128, 128, 8
    $region13: #{tpu_custom_call.1} parent=1 // pred_fallthru
      _
    // Predicated region
    $region14: #{tpu_custom_call.1} parent=1 // pred_check
      _
    $region15: #{tpu_custom_call.1} parent=1 // pred_check_branch
      %53 = sbr.rel (0) target = $region17
    $region16: #{tpu_custom_call.1} parent=1 // pred_region
      _
    $region17: #{tpu_custom_call.1} parent=1 // pred_fallthru
      _
    // Predicated region
    $region18: #{tpu_custom_call.1} parent=1 // pred_check
      _
    $region19: #{tpu_custom_call.1} parent=1 // pred_check_branch
      %55 = sbr.rel (0) target = $region21
    $region20: #{tpu_custom_call.1} parent=1 // pred_region
      _
    $region21: #{tpu_custom_call.1} parent=1 // pred_fallthru
      _
    // Predicated region
    $region22: #{tpu_custom_call.1} parent=1 // pred_check
      _
    $region23: #{tpu_custom_call.1} parent=1 // pred_check_branch
      %57 = sbr.rel (0) target = $region25
    $region24: #{tpu_custom_call.1} parent=1 // pred_region
      _
    $region25: #{tpu_custom_call.1} parent=1 // pred_fallthru
      _
    // Predicated region
    $region26: #{tpu_custom_call.1} parent=1 // pred_check
      _
    $region27: #{tpu_custom_call.1} parent=1 // pred_check_branch
      %59 = sbr.rel (0) target = $region29
    $region28: #{tpu_custom_call.1} parent=1 // pred_region
      _
    $region29: #{tpu_custom_call.1} parent=1 // pred_fallthru
      _
    // Predicated region
    $region30: #{tpu_custom_call.1} parent=1 // pred_check
      _
    $region31: #{tpu_custom_call.1} parent=1 // pred_check_branch
      %61 = sbr.rel (0) target = $region33
    $region32: #{tpu_custom_call.1} parent=1 // pred_region
      _
    $region33: #{tpu_custom_call.1} parent=1 // pred_fallthru
      _
    // Predicated region
    $region34: #{tpu_custom_call.1} parent=1 // pred_check
      _
    $region35: #{tpu_custom_call.1} parent=1 // pred_check_branch
      %63 = sbr.rel (0) target = $region37
    $region36: #{tpu_custom_call.1} parent=1 // pred_region
      %s65 = ssub.s32 16, 16
      %66 = vsyncadd [#allocation8], %s65
      %s68 = sshll.u32 [#allocation9], 4
      %s69 = int_to_ptr.vmem [resolvable:$true] %s68
      %71 = dma.hbm_to_vmem [thread:$0]  %s8, 16, %s69, [#allocation8]
    $region37: #{tpu_custom_call.1} parent=1 // pred_fallthru
      _
    // Predicated region
    $region38: #{tpu_custom_call.1} parent=1 // pred_check
      _
    $region39: #{tpu_custom_call.1} parent=1 // pred_check_branch
      %73 = sbr.rel (0) target = $region41
    $region40: #{tpu_custom_call.1} parent=1 // pred_region
      _
    $region41: #{tpu_custom_call.1} parent=1 // pred_fallthru
      _
    // Predicated region
    $region42: #{tpu_custom_call.1} parent=1 // pred_check
      _
    $region43: #{tpu_custom_call.1} parent=1 // pred_check_branch
      %75 = sbr.rel (0) target = $region45
    $region44: #{tpu_custom_call.1} parent=1 // pred_region
      _
    $region45: #{tpu_custom_call.1} parent=1 // pred_fallthru
      _
    // Predicated region
    $region46: #{tpu_custom_call.1} parent=1 // pred_check
      _
    $region47: #{tpu_custom_call.1} parent=1 // pred_check_branch
      %77 = sbr.rel (0) target = $region49
    $region48: #{tpu_custom_call.1} parent=1 // pred_region
      %78 = dma.done [#allocation5], 16
    $region49: #{tpu_custom_call.1} parent=1 // pred_fallthru
      _
    // Predicated region
    $region50: #{tpu_custom_call.1} parent=1 // pred_check
      _
    $region51: #{tpu_custom_call.1} parent=1 // pred_check_branch
      %80 = sbr.rel (0) target = $region53
    $region52: #{tpu_custom_call.1} parent=1 // pred_region
      %81 = dma.done [#allocation3], 256
    $region53: #{tpu_custom_call.1} parent=1 // pred_fallthru
      _
    // Predicated region
    $region54: #{tpu_custom_call.1} parent=1 // pred_check
      _
    $region55: #{tpu_custom_call.1} parent=1 // pred_check_branch
      %83 = sbr.rel (0) target = $region57
    $region56: #{tpu_custom_call.1} parent=1 // pred_region
      %84 = dma.done [#allocation8], 256
    $region57: #{tpu_custom_call.1} parent=1 // pred_fallthru
      _
    // Predicated region
    $region58: #{tpu_custom_call.1} parent=1 // pred_check
      _
    $region59: #{tpu_custom_call.1} parent=1 // pred_check_branch
      %86 = sbr.rel (0) target = $region61
    $region60: #{tpu_custom_call.1} parent=1 // pred_region
      %87 = dma.done [#allocation8], 16
    $region61: #{tpu_custom_call.1} parent=1 // pred_fallthru
      _
    %88 = sfence
    %s89 = sld [smem:[#allocation2]]
    %s90 = sld [smem:[#allocation2 + $0x1]]
    %s91 = sld [smem:[#allocation2 + $0x2]]
    %s92 = sld [smem:[#allocation2 + $0x3]]
    %v93 = vld [vmem:[#allocation6] sm:$0xff]
    %s94 = scalar_lea.vmem [#allocation6], 8
    %v95 = vld [vmem:[%s94] sm:$0xff]
    %vm96 = vcmask 261120
    %v97 = vsel %vm96, %v93, 0.0
    %98 = vadd.xlane.f32.xlu0 %v97
    %v99 = vpop.xlane.xlu0 %98
    %v100 = vsel %vm96, %v95, 0.0
    %101 = vadd.xlane.f32.xlu0 %v100
    %v102 = vpop.xlane.xlu0 %101
    %v103 = vrcp.pop 32.0
    %v104 = vmul.f32 %v99, %v103
    %v105 = vmul.f32 %v102, %v103
    %v106 = vsub.f32 %v93, %v104
    %v107 = vsub.f32 %v95, %v105
    %v108 = vmul.f32 %v106, %v106
    %v109 = vmul.f32 %v107, %v107
    %v110 = vsel %vm96, %v108, 0.0
    %111 = vadd.xlane.f32.xlu0 %v110
    %v112 = vpop.xlane.xlu0 %111
    %v113 = vsel %vm96, %v109, 0.0
    %114 = vadd.xlane.f32.xlu0 %v113
    %v115 = vpop.xlane.xlu0 %114
    %v116 = vrcp.pop 31.0
    %v117 = vmul.f32 %v112, %v116
    %v118 = vmul.f32 %v115, %v116
    %v119 = vrsqrt.pop %v117
    %v120 = vmul.f32 %v117, %v119
    %vm121 = vcmp.eq.f32.partialorder %v117, inf
    %v122 = vsel %vm121, %v117, %v120
    %vm123 = vcmp.eq.f32.partialorder %v117, 0.0
    %v124 = vand.u32 %v117, 2147483648
    %v125 = vsel %vm123, %v124, %v122
    %v126 = vrsqrt.pop %v118
    %v127 = vmul.f32 %v118, %v126
    %vm128 = vcmp.eq.f32.partialorder %v118, inf
    %v129 = vsel %vm128, %v118, %v127
    %vm130 = vcmp.eq.f32.partialorder %v118, 0.0
    %v131 = vand.u32 %v118, 2147483648
    %v132 = vsel %vm130, %v131, %v129
    %v133 = vstv %s89
    %v134 = vmul.f32 %v133, %v106
    %v135 = vmul.f32 %v133, %v107
    %v136 = vadd.f32 %v125, 1e-06
    %v137 = vadd.f32 %v132, 1e-06
    %v138 = vrcp.pop %v136
    %v139 = vmul.f32 %v134, %v138
    %v140 = vrcp.pop %v137
    %v141 = vmul.f32 %v135, %v140
    %v142 = vstv %s90
    %v143 = vadd.f32 %v139, %v142
    %v144 = vadd.f32 %v141, %v142
    %v145 = vld [vmem:[%s3] sm:$0xff]
    %v146 = vld [vmem:[%s3 + $0x8] sm:$0xff]
    %v147 = vld [vmem:[%s3 + $0x10] sm:$0xff]
    %v148 = vld [vmem:[%s3 + $0x18] sm:$0xff]
    %v149 = vld [vmem:[%s4] sm:$0x1]
    %v151 = vlaneseq
    %v152 = vshrl.u32 %v151, 7
    %v153 = vsub.s32 0, %v152
    %v154 = vrot.slane %v149, %v153
    %v157 = vsel %vm96, %v143, 0
    %v160 = vsel %vm96, %v144, 0
    %162 = vmatprep.subr.mxu0 0.0
    %163 = vmatpush1.msra.mxu0 %v145
    %164 = vmatprep.subr.mxu0 0.0
    %165 = vmatpush1.msra.mxu0 %v146
    %166 = vmatprep.subr.mxu0 0.0
    %167 = vmatpush1.msra.mxu0 %v147
    %168 = vmatprep.subr.mxu0 0.0
    %169 = vmatpush1.msra.mxu0 %v148
    %170 = vmatprep.subr.mxu0 0.0
    %171 = vmatpush1.msra.mxu0 0.0
    %172 = vmatprep.subr.mxu0 0.0
    %173 = vmatpush1.msra.mxu0 0.0
    %174 = vmatprep.subr.mxu0 0.0
    %175 = vmatpush1.msra.mxu0 0.0
    %176 = vmatprep.subr.mxu0 0.0
    %177 = vmatpush1.msra.mxu0 0.0
    %178 = vmatprep.subr.mxu0 0.0
    %179 = vmatpush1.msra.mxu0 0.0
    %180 = vmatprep.subr.mxu0 0.0
    %181 = vmatpush1.msra.mxu0 0.0
    %182 = vmatprep.subr.mxu0 0.0
    %183 = vmatpush1.msra.mxu0 0.0
    %184 = vmatprep.subr.mxu0 0.0
    %185 = vmatpush1.msra.mxu0 0.0
    %186 = vmatprep.subr.mxu0 0.0
    %187 = vmatpush1.msra.mxu0 0.0
    %188 = vmatprep.subr.mxu0 0.0
    %189 = vmatpush1.msra.mxu0 0.0
    %190 = vmatprep.subr.mxu0 0.0
    %191 = vmatpush1.msra.mxu0 0.0
    %192 = vmatprep.subr.mxu0 0.0
    %193 = vmatpush1.msra.mxu0 0.0
    %194 = vmatprep.subr.mxu0 0.0
    %195 = vmatpush1.msra.mxu0 0.0
    %196 = vmatprep.subr.mxu0 0.0
    %197 = vmatpush1.msra.mxu0 0.0
    %198 = vmatprep.subr.mxu0 0.0
    %199 = vmatpush1.msra.mxu0 0.0
    %200 = vmatprep.subr.mxu0 0.0
    %201 = vmatpush1.msra.mxu0 0.0
    %202 = vmatprep.subr.mxu0 0.0
    %203 = vmatpush1.msra.mxu0 0.0
    %204 = vmatprep.subr.mxu0 0.0
    %205 = vmatpush1.msra.mxu0 0.0
    %206 = vmatprep.subr.mxu0 0.0
    %207 = vmatpush1.msra.mxu0 0.0
    %208 = vmatprep.subr.mxu0 0.0
    %209 = vmatpush1.msra.mxu0 0.0
    %210 = vmatprep.subr.mxu0 0.0
    %211 = vmatpush1.msra.mxu0 0.0
    %212 = vmatprep.subr.mxu0 0.0
    %213 = vmatpush1.msra.mxu0 0.0
    %214 = vmatprep.subr.mxu0 0.0
    %215 = vmatpush1.msra.mxu0 0.0
    %216 = vmatprep.subr.mxu0 0.0
    %217 = vmatpush1.msra.mxu0 0.0
    %218 = vmatprep.subr.mxu0 0.0
    %219 = vmatpush1.msra.mxu0 0.0
    %220 = vmatprep.subr.mxu0 0.0
    %221 = vmatpush1.msra.mxu0 0.0
    %222 = vmatprep.subr.mxu0 0.0
    %223 = vmatpush1.msra.mxu0 0.0
    %224 = vmatprep.subr.mxu0 0.0
    %225 = vmatpush1.msra.mxu0 0.0
    %226 = vmatprep.mubr.f32.mxu0 0.0
    %227 = vmatmul.mubr.f32.gmra.mrb[0].mxu0 %v157
    %v228 = vpop.f32.mrb[0].mxu0
    %v229 = vadd.f32 %v154, %v228
    %v230 = vpop.f32.mrb[0].mxu0
    %231 = vmatprep.mubr.f32.mxu0 0.0
    %232 = vmatmul.mubr.f32.gmra.mrb[0].mxu0 %v160
    %v233 = vpop.f32.mrb[0].mxu0
    %v234 = vadd.f32 %v154, %v233
    %v235 = vpop.f32.mrb[0].mxu0
    %236 = vdwg.mxu0
    %v237 = vld [vmem:[#allocation7] sm:$0xff]
    %vm238 = vcmp.eq.s32.totalorder %v237, 0
    %240 = vrot.lane.b32.xlu0 %v229, 96
    %v241 = vpop.permute.xlu0 %240
    %vm242 = vcmask 64512
    %v243 = vsel %vm242, %v229, 0
    %v245 = vsel %vm242, %v241, 0
    %247 = vmatprep.subr.mxu0 0.0
    %248 = vmatpush1.xpose.msra.mxu0 %v245
    %249 = vmatprep.subr.mxu0 0.0
    %250 = vmatpush1.xpose.msra.mxu0 0.0
    %251 = vmatprep.subr.mxu0 0.0
    %252 = vmatpush1.xpose.msra.mxu0 0.0
    %253 = vmatprep.subr.mxu0 0.0
    %254 = vmatpush1.xpose.msra.mxu0 0.0
    %255 = vmatprep.subr.mxu0 0.0
    %256 = vmatpush1.xpose.msra.mxu0 0.0
    %257 = vmatprep.subr.mxu0 0.0
    %258 = vmatpush1.xpose.msra.mxu0 0.0
    %259 = vmatprep.subr.mxu0 0.0
    %260 = vmatpush1.xpose.msra.mxu0 0.0
    %261 = vmatprep.subr.mxu0 0.0
    %262 = vmatpush1.xpose.msra.mxu0 0.0
    %263 = vmatprep.subr.mxu0 0.0
    %264 = vmatpush1.xpose.msra.mxu0 0.0
    %265 = vmatprep.subr.mxu0 0.0
    %266 = vmatpush1.xpose.msra.mxu0 0.0
    %267 = vmatprep.subr.mxu0 0.0
    %268 = vmatpush1.xpose.msra.mxu0 0.0
    %269 = vmatprep.subr.mxu0 0.0
    %270 = vmatpush1.xpose.msra.mxu0 0.0
    %271 = vmatprep.subr.mxu0 0.0
    %272 = vmatpush1.xpose.msra.mxu0 0.0
    %273 = vmatprep.subr.mxu0 0.0
    %274 = vmatpush1.xpose.msra.mxu0 0.0
    %275 = vmatprep.subr.mxu0 0.0
    %276 = vmatpush1.xpose.msra.mxu0 0.0
    %277 = vmatprep.subr.mxu0 0.0
    %278 = vmatpush1.xpose.msra.mxu0 0.0
    %279 = vmatprep.subr.mxu0 0.0
    %280 = vmatpush1.xpose.msra.mxu0 0.0
    %281 = vmatprep.subr.mxu0 0.0
    %282 = vmatpush1.xpose.msra.mxu0 0.0
    %283 = vmatprep.subr.mxu0 0.0
    %284 = vmatpush1.xpose.msra.mxu0 0.0
    %285 = vmatprep.subr.mxu0 0.0
    %286 = vmatpush1.xpose.msra.mxu0 0.0
    %287 = vmatprep.subr.mxu0 0.0
    %288 = vmatpush1.xpose.msra.mxu0 0.0
    %289 = vmatprep.subr.mxu0 0.0
    %290 = vmatpush1.xpose.msra.mxu0 0.0
    %291 = vmatprep.subr.mxu0 0.0
    %292 = vmatpush1.xpose.msra.mxu0 0.0
    %293 = vmatprep.subr.mxu0 0.0
    %294 = vmatpush1.xpose.msra.mxu0 0.0
    %295 = vmatprep.subr.mxu0 0.0
    %296 = vmatpush1.xpose.msra.mxu0 0.0
    %297 = vmatprep.subr.mxu0 0.0
    %298 = vmatpush1.xpose.msra.mxu0 0.0
    %299 = vmatprep.subr.mxu0 0.0
    %300 = vmatpush1.xpose.msra.mxu0 0.0
    %301 = vmatprep.subr.mxu0 0.0
    %302 = vmatpush1.xpose.msra.mxu0 0.0
    %303 = vmatprep.subr.mxu0 0.0
    %304 = vmatpush1.xpose.msra.mxu0 0.0
    %305 = vmatprep.subr.mxu0 0.0
    %306 = vmatpush1.xpose.msra.mxu0 0.0
    %307 = vmatprep.subr.mxu0 0.0
    %308 = vmatpush1.xpose.msra.mxu0 0.0
    %309 = vmatprep.subr.mxu0 0.0
    %310 = vmatpush1.xpose.msra.mxu0 0.0
    %311 = vmatprep.mubr.f32.mxu0 0.0
    %312 = vmatmul.mubr.f32.gmra.mrb[0].mxu0 %v243
    %v313 = vpop.f32.mrb[0].mxu0
    %v314 = vadd.f32 0.0, %v313
    %v315 = vpop.f32.mrb[0].mxu0
    %316 = vdwg.mxu0
    %v317 = vsel %vm238, -1e+09, %v314
    %v318 = vsel %vm242, %v317, -inf
    %319 = vmax.xlane.f32.xlu0 %v318
    %v320 = vpop.xlane.xlu0 %319
    %v321 = vsub.f32 %v317, %v320
    %v322 = vmul.f32 %v321, 1.442695
    %v323 = vpow.pop %v322
    %v324 = vsel %vm242, %v323, 0.0
    %325 = vadd.xlane.f32.xlu0 %v324
    %v326 = vpop.xlane.xlu0 %325
    %v327 = vrcp.pop %v326
    %v328 = vmul.f32 %v323, %v327
    %329 = vrot.lane.b32.xlu0 %v229, 64
    %v330 = vpop.permute.xlu0 %329
    %v333 = vsel %vm242, %v328, 0
    %335 = vmatprep.subr.mxu0 0.0
    %336 = vmatpush1.msra.mxu0 %v330
    %337 = vmatprep.subr.mxu0 0.0
    %338 = vmatpush1.msra.mxu0 0.0
    %339 = vmatprep.subr.mxu0 0.0
    %340 = vmatpush1.msra.mxu0 0.0
    %341 = vmatprep.subr.mxu0 0.0
    %342 = vmatpush1.msra.mxu0 0.0
    %343 = vmatprep.subr.mxu0 0.0
    %344 = vmatpush1.msra.mxu0 0.0
    %345 = vmatprep.subr.mxu0 0.0
    %346 = vmatpush1.msra.mxu0 0.0
    %347 = vmatprep.subr.mxu0 0.0
    %348 = vmatpush1.msra.mxu0 0.0
    %349 = vmatprep.subr.mxu0 0.0
    %350 = vmatpush1.msra.mxu0 0.0
    %351 = vmatprep.subr.mxu0 0.0
    %352 = vmatpush1.msra.mxu0 0.0
    %353 = vmatprep.subr.mxu0 0.0
    %354 = vmatpush1.msra.mxu0 0.0
    %355 = vmatprep.subr.mxu0 0.0
    %356 = vmatpush1.msra.mxu0 0.0
    %357 = vmatprep.subr.mxu0 0.0
    %358 = vmatpush1.msra.mxu0 0.0
    %359 = vmatprep.subr.mxu0 0.0
    %360 = vmatpush1.msra.mxu0 0.0
    %361 = vmatprep.subr.mxu0 0.0
    %362 = vmatpush1.msra.mxu0 0.0
    %363 = vmatprep.subr.mxu0 0.0
    %364 = vmatpush1.msra.mxu0 0.0
    %365 = vmatprep.subr.mxu0 0.0
    %366 = vmatpush1.msra.mxu0 0.0
    %367 = vmatprep.subr.mxu0 0.0
    %368 = vmatpush1.msra.mxu0 0.0
    %369 = vmatprep.subr.mxu0 0.0
    %370 = vmatpush1.msra.mxu0 0.0
    %371 = vmatprep.subr.mxu0 0.0
    %372 = vmatpush1.msra.mxu0 0.0
    %373 = vmatprep.subr.mxu0 0.0
    %374 = vmatpush1.msra.mxu0 0.0
    %375 = vmatprep.subr.mxu0 0.0
    %376 = vmatpush1.msra.mxu0 0.0
    %377 = vmatprep.subr.mxu0 0.0
    %378 = vmatpush1.msra.mxu0 0.0
    %379 = vmatprep.subr.mxu0 0.0
    %380 = vmatpush1.msra.mxu0 0.0
    %381 = vmatprep.subr.mxu0 0.0
    %382 = vmatpush1.msra.mxu0 0.0
    %383 = vmatprep.subr.mxu0 0.0
    %384 = vmatpush1.msra.mxu0 0.0
    %385 = vmatprep.subr.mxu0 0.0
    %386 = vmatpush1.msra.mxu0 0.0
    %387 = vmatprep.subr.mxu0 0.0
    %388 = vmatpush1.msra.mxu0 0.0
    %389 = vmatprep.subr.mxu0 0.0
    %390 = vmatpush1.msra.mxu0 0.0
    %391 = vmatprep.subr.mxu0 0.0
    %392 = vmatpush1.msra.mxu0 0.0
    %393 = vmatprep.subr.mxu0 0.0
    %394 = vmatpush1.msra.mxu0 0.0
    %395 = vmatprep.subr.mxu0 0.0
    %396 = vmatpush1.msra.mxu0 0.0
    %397 = vmatprep.subr.mxu0 0.0
    %398 = vmatpush1.msra.mxu0 0.0
    %399 = vmatprep.mubr.f32.mxu0 0.0
    %400 = vmatmul.mubr.f32.gmra.mrb[0].mxu0 %v333
    %v401 = vpop.f32.mrb[0].mxu0
    %v402 = vadd.f32 0.0, %v401
    %v403 = vpop.f32.mrb[0].mxu0
    %404 = vdwg.mxu0
    %v405 = vld [vmem:[%s5] sm:$0xff]
    %406 = vrot.lane.b32.xlu0 %v229, 120
    %v407 = vpop.permute.xlu0 %406
    %408 = vrot.lane.b32.xlu0 %v229, 88
    %v409 = vpop.permute.xlu0 %408
    %v410 = vsel %vm242, %v407, 0
    %v412 = vsel %vm242, %v409, 0
    %414 = vmatprep.subr.mxu0 0.0
    %415 = vmatpush1.xpose.msra.mxu0 %v412
    %416 = vmatprep.subr.mxu0 0.0
    %417 = vmatpush1.xpose.msra.mxu0 0.0
    %418 = vmatprep.subr.mxu0 0.0
    %419 = vmatpush1.xpose.msra.mxu0 0.0
    %420 = vmatprep.subr.mxu0 0.0
    %421 = vmatpush1.xpose.msra.mxu0 0.0
    %422 = vmatprep.subr.mxu0 0.0
    %423 = vmatpush1.xpose.msra.mxu0 0.0
    %424 = vmatprep.subr.mxu0 0.0
    %425 = vmatpush1.xpose.msra.mxu0 0.0
    %426 = vmatprep.subr.mxu0 0.0
    %427 = vmatpush1.xpose.msra.mxu0 0.0
    %428 = vmatprep.subr.mxu0 0.0
    %429 = vmatpush1.xpose.msra.mxu0 0.0
    %430 = vmatprep.subr.mxu0 0.0
    %431 = vmatpush1.xpose.msra.mxu0 0.0
    %432 = vmatprep.subr.mxu0 0.0
    %433 = vmatpush1.xpose.msra.mxu0 0.0
    %434 = vmatprep.subr.mxu0 0.0
    %435 = vmatpush1.xpose.msra.mxu0 0.0
    %436 = vmatprep.subr.mxu0 0.0
    %437 = vmatpush1.xpose.msra.mxu0 0.0
    %438 = vmatprep.subr.mxu0 0.0
    %439 = vmatpush1.xpose.msra.mxu0 0.0
    %440 = vmatprep.subr.mxu0 0.0
    %441 = vmatpush1.xpose.msra.mxu0 0.0
    %442 = vmatprep.subr.mxu0 0.0
    %443 = vmatpush1.xpose.msra.mxu0 0.0
    %444 = vmatprep.subr.mxu0 0.0
    %445 = vmatpush1.xpose.msra.mxu0 0.0
    %446 = vmatprep.subr.mxu0 0.0
    %447 = vmatpush1.xpose.msra.mxu0 0.0
    %448 = vmatprep.subr.mxu0 0.0
    %449 = vmatpush1.xpose.msra.mxu0 0.0
    %450 = vmatprep.subr.mxu0 0.0
    %451 = vmatpush1.xpose.msra.mxu0 0.0
    %452 = vmatprep.subr.mxu0 0.0
    %453 = vmatpush1.xpose.msra.mxu0 0.0
    %454 = vmatprep.subr.mxu0 0.0
    %455 = vmatpush1.xpose.msra.mxu0 0.0
    %456 = vmatprep.subr.mxu0 0.0
    %457 = vmatpush1.xpose.msra.mxu0 0.0
    %458 = vmatprep.subr.mxu0 0.0
    %459 = vmatpush1.xpose.msra.mxu0 0.0
    %460 = vmatprep.subr.mxu0 0.0
    %461 = vmatpush1.xpose.msra.mxu0 0.0
    %462 = vmatprep.subr.mxu0 0.0
    %463 = vmatpush1.xpose.msra.mxu0 0.0
    %464 = vmatprep.subr.mxu0 0.0
    %465 = vmatpush1.xpose.msra.mxu0 0.0
    %466 = vmatprep.subr.mxu0 0.0
    %467 = vmatpush1.xpose.msra.mxu0 0.0
    %468 = vmatprep.subr.mxu0 0.0
    %469 = vmatpush1.xpose.msra.mxu0 0.0
    %470 = vmatprep.subr.mxu0 0.0
    %471 = vmatpush1.xpose.msra.mxu0 0.0
    %472 = vmatprep.subr.mxu0 0.0
    %473 = vmatpush1.xpose.msra.mxu0 0.0
    %474 = vmatprep.subr.mxu0 0.0
    %475 = vmatpush1.xpose.msra.mxu0 0.0
    %476 = vmatprep.subr.mxu0 0.0
    %477 = vmatpush1.xpose.msra.mxu0 0.0
    %478 = vmatprep.mubr.f32.mxu0 0.0
    %479 = vmatmul.mubr.f32.gmra.mrb[0].mxu0 %v410
    %v480 = vpop.f32.mrb[0].mxu0
    %v481 = vadd.f32 0.0, %v480
    %v482 = vpop.f32.mrb[0].mxu0
    %483 = vdwg.mxu0
    %v484 = vsel %vm238, -1e+09, %v481
    %v485 = vsel %vm242, %v484, -inf
    %486 = vmax.xlane.f32.xlu0 %v485
    %v487 = vpop.xlane.xlu0 %486
    %v488 = vsub.f32 %v484, %v487
    %v489 = vmul.f32 %v488, 1.442695
    %v490 = vpow.pop %v489
    %v491 = vsel %vm242, %v490, 0.0
    %492 = vadd.xlane.f32.xlu0 %v491
    %v493 = vpop.xlane.xlu0 %492
    %v494 = vrcp.pop %v493
    %v495 = vmul.f32 %v490, %v494
    %496 = vrot.lane.b32.xlu0 %v229, 56
    %v497 = vpop.permute.xlu0 %496
    %v500 = vsel %vm242, %v495, 0
    %502 = vmatprep.subr.mxu0 0.0
    %503 = vmatpush1.msra.mxu0 %v497
    %504 = vmatprep.subr.mxu0 0.0
    %505 = vmatpush1.msra.mxu0 0.0
    %506 = vmatprep.subr.mxu0 0.0
    %507 = vmatpush1.msra.mxu0 0.0
    %508 = vmatprep.subr.mxu0 0.0
    %509 = vmatpush1.msra.mxu0 0.0
    %510 = vmatprep.subr.mxu0 0.0
    %511 = vmatpush1.msra.mxu0 0.0
    %512 = vmatprep.subr.mxu0 0.0
    %513 = vmatpush1.msra.mxu0 0.0
    %514 = vmatprep.subr.mxu0 0.0
    %515 = vmatpush1.msra.mxu0 0.0
    %516 = vmatprep.subr.mxu0 0.0
    %517 = vmatpush1.msra.mxu0 0.0
    %518 = vmatprep.subr.mxu0 0.0
    %519 = vmatpush1.msra.mxu0 0.0
    %520 = vmatprep.subr.mxu0 0.0
    %521 = vmatpush1.msra.mxu0 0.0
    %522 = vmatprep.subr.mxu0 0.0
    %523 = vmatpush1.msra.mxu0 0.0
    %524 = vmatprep.subr.mxu0 0.0
    %525 = vmatpush1.msra.mxu0 0.0
    %526 = vmatprep.subr.mxu0 0.0
    %527 = vmatpush1.msra.mxu0 0.0
    %528 = vmatprep.subr.mxu0 0.0
    %529 = vmatpush1.msra.mxu0 0.0
    %530 = vmatprep.subr.mxu0 0.0
    %531 = vmatpush1.msra.mxu0 0.0
    %532 = vmatprep.subr.mxu0 0.0
    %533 = vmatpush1.msra.mxu0 0.0
    %534 = vmatprep.subr.mxu0 0.0
    %535 = vmatpush1.msra.mxu0 0.0
    %536 = vmatprep.subr.mxu0 0.0
    %537 = vmatpush1.msra.mxu0 0.0
    %538 = vmatprep.subr.mxu0 0.0
    %539 = vmatpush1.msra.mxu0 0.0
    %540 = vmatprep.subr.mxu0 0.0
    %541 = vmatpush1.msra.mxu0 0.0
    %542 = vmatprep.subr.mxu0 0.0
    %543 = vmatpush1.msra.mxu0 0.0
    %544 = vmatprep.subr.mxu0 0.0
    %545 = vmatpush1.msra.mxu0 0.0
    %546 = vmatprep.subr.mxu0 0.0
    %547 = vmatpush1.msra.mxu0 0.0
    %548 = vmatprep.subr.mxu0 0.0
    %549 = vmatpush1.msra.mxu0 0.0
    %550 = vmatprep.subr.mxu0 0.0
    %551 = vmatpush1.msra.mxu0 0.0
    %552 = vmatprep.subr.mxu0 0.0
    %553 = vmatpush1.msra.mxu0 0.0
    %554 = vmatprep.subr.mxu0 0.0
    %555 = vmatpush1.msra.mxu0 0.0
    %556 = vmatprep.subr.mxu0 0.0
    %557 = vmatpush1.msra.mxu0 0.0
    %558 = vmatprep.subr.mxu0 0.0
    %559 = vmatpush1.msra.mxu0 0.0
    %560 = vmatprep.subr.mxu0 0.0
    %561 = vmatpush1.msra.mxu0 0.0
    %562 = vmatprep.subr.mxu0 0.0
    %563 = vmatpush1.msra.mxu0 0.0
    %564 = vmatprep.subr.mxu0 0.0
    %565 = vmatpush1.msra.mxu0 0.0
    %566 = vmatprep.mubr.f32.mxu0 0.0
    %567 = vmatmul.mubr.f32.gmra.mrb[0].mxu0 %v500
    %v568 = vpop.f32.mrb[0].mxu0
    %v569 = vadd.f32 0.0, %v568
    %v570 = vpop.f32.mrb[0].mxu0
    %571 = vdwg.mxu0
    %v572 = vld [vmem:[%s5 + $0x8] sm:$0xff]
    %v574 = vsel %vm242, %v569, 0
    %576 = vmatprep.subr.mxu0 0.0
    %577 = vmatpush1.msra.mxu0 %v572
    %578 = vmatprep.subr.mxu0 0.0
    %579 = vmatpush1.msra.mxu0 0.0
    %580 = vmatprep.subr.mxu0 0.0
    %581 = vmatpush1.msra.mxu0 0.0
    %582 = vmatprep.subr.mxu0 0.0
    %583 = vmatpush1.msra.mxu0 0.0
    %584 = vmatprep.subr.mxu0 0.0
    %585 = vmatpush1.msra.mxu0 0.0
    %586 = vmatprep.subr.mxu0 0.0
    %587 = vmatpush1.msra.mxu0 0.0
    %588 = vmatprep.subr.mxu0 0.0
    %589 = vmatpush1.msra.mxu0 0.0
    %590 = vmatprep.subr.mxu0 0.0
    %591 = vmatpush1.msra.mxu0 0.0
    %592 = vmatprep.subr.mxu0 0.0
    %593 = vmatpush1.msra.mxu0 0.0
    %594 = vmatprep.subr.mxu0 0.0
    %595 = vmatpush1.msra.mxu0 0.0
    %596 = vmatprep.subr.mxu0 0.0
    %597 = vmatpush1.msra.mxu0 0.0
    %598 = vmatprep.subr.mxu0 0.0
    %599 = vmatpush1.msra.mxu0 0.0
    %600 = vmatprep.subr.mxu0 0.0
    %601 = vmatpush1.msra.mxu0 0.0
    %602 = vmatprep.subr.mxu0 0.0
    %603 = vmatpush1.msra.mxu0 0.0
    %604 = vmatprep.subr.mxu0 0.0
    %605 = vmatpush1.msra.mxu0 0.0
    %606 = vmatprep.subr.mxu0 0.0
    %607 = vmatpush1.msra.mxu0 0.0
    %608 = vmatprep.subr.mxu0 0.0
    %609 = vmatpush1.msra.mxu0 0.0
    %610 = vmatprep.subr.mxu0 0.0
    %611 = vmatpush1.msra.mxu0 0.0
    %612 = vmatprep.subr.mxu0 0.0
    %613 = vmatpush1.msra.mxu0 0.0
    %614 = vmatprep.subr.mxu0 0.0
    %615 = vmatpush1.msra.mxu0 0.0
    %616 = vmatprep.subr.mxu0 0.0
    %617 = vmatpush1.msra.mxu0 0.0
    %618 = vmatprep.subr.mxu0 0.0
    %619 = vmatpush1.msra.mxu0 0.0
    %620 = vmatprep.subr.mxu0 0.0
    %621 = vmatpush1.msra.mxu0 0.0
    %622 = vmatprep.subr.mxu0 0.0
    %623 = vmatpush1.msra.mxu0 0.0
    %624 = vmatprep.subr.mxu0 0.0
    %625 = vmatpush1.msra.mxu0 0.0
    %626 = vmatprep.subr.mxu0 0.0
    %627 = vmatpush1.msra.mxu0 0.0
    %628 = vmatprep.subr.mxu0 0.0
    %629 = vmatpush1.msra.mxu0 0.0
    %630 = vmatprep.subr.mxu0 0.0
    %631 = vmatpush1.msra.mxu0 0.0
    %632 = vmatprep.subr.mxu0 0.0
    %633 = vmatpush1.msra.mxu0 0.0
    %634 = vmatprep.subr.mxu0 0.0
    %635 = vmatpush1.msra.mxu0 0.0
    %636 = vmatprep.subr.mxu0 0.0
    %637 = vmatpush1.msra.mxu0 0.0
    %638 = vmatprep.subr.mxu0 0.0
    %639 = vmatpush1.msra.mxu0 0.0
    %640 = vmatprep.mubr.f32.mxu0 0.0
    %641 = vmatmul.mubr.f32.gmra.mrb[0].mxu0 %v574
    %v642 = vpop.f32.mrb[0].mxu0
    %v643 = vadd.f32 0.0, %v642
    %v644 = vpop.f32.mrb[0].mxu0
    %645 = vdwg.mxu0
    %v647 = vsel %vm242, %v402, 0
    %649 = vmatprep.subr.mxu0 0.0
    %650 = vmatpush1.msra.mxu0 %v405
    %651 = vmatprep.subr.mxu0 0.0
    %652 = vmatpush1.msra.mxu0 0.0
    %653 = vmatprep.subr.mxu0 0.0
    %654 = vmatpush1.msra.mxu0 0.0
    %655 = vmatprep.subr.mxu0 0.0
    %656 = vmatpush1.msra.mxu0 0.0
    %657 = vmatprep.subr.mxu0 0.0
    %658 = vmatpush1.msra.mxu0 0.0
    %659 = vmatprep.subr.mxu0 0.0
    %660 = vmatpush1.msra.mxu0 0.0
    %661 = vmatprep.subr.mxu0 0.0
    %662 = vmatpush1.msra.mxu0 0.0
    %663 = vmatprep.subr.mxu0 0.0
    %664 = vmatpush1.msra.mxu0 0.0
    %665 = vmatprep.subr.mxu0 0.0
    %666 = vmatpush1.msra.mxu0 0.0
    %667 = vmatprep.subr.mxu0 0.0
    %668 = vmatpush1.msra.mxu0 0.0
    %669 = vmatprep.subr.mxu0 0.0
    %670 = vmatpush1.msra.mxu0 0.0
    %671 = vmatprep.subr.mxu0 0.0
    %672 = vmatpush1.msra.mxu0 0.0
    %673 = vmatprep.subr.mxu0 0.0
    %674 = vmatpush1.msra.mxu0 0.0
    %675 = vmatprep.subr.mxu0 0.0
    %676 = vmatpush1.msra.mxu0 0.0
    %677 = vmatprep.subr.mxu0 0.0
    %678 = vmatpush1.msra.mxu0 0.0
    %679 = vmatprep.subr.mxu0 0.0
    %680 = vmatpush1.msra.mxu0 0.0
    %681 = vmatprep.subr.mxu0 0.0
    %682 = vmatpush1.msra.mxu0 0.0
    %683 = vmatprep.subr.mxu0 0.0
    %684 = vmatpush1.msra.mxu0 0.0
    %685 = vmatprep.subr.mxu0 0.0
    %686 = vmatpush1.msra.mxu0 0.0
    %687 = vmatprep.subr.mxu0 0.0
    %688 = vmatpush1.msra.mxu0 0.0
    %689 = vmatprep.subr.mxu0 0.0
    %690 = vmatpush1.msra.mxu0 0.0
    %691 = vmatprep.subr.mxu0 0.0
    %692 = vmatpush1.msra.mxu0 0.0
    %693 = vmatprep.subr.mxu0 0.0
    %694 = vmatpush1.msra.mxu0 0.0
    %695 = vmatprep.subr.mxu0 0.0
    %696 = vmatpush1.msra.mxu0 0.0
    %697 = vmatprep.subr.mxu0 0.0
    %698 = vmatpush1.msra.mxu0 0.0
    %699 = vmatprep.subr.mxu0 0.0
    %700 = vmatpush1.msra.mxu0 0.0
    %701 = vmatprep.subr.mxu0 0.0
    %702 = vmatpush1.msra.mxu0 0.0
    %703 = vmatprep.subr.mxu0 0.0
    %704 = vmatpush1.msra.mxu0 0.0
    %705 = vmatprep.subr.mxu0 0.0
    %706 = vmatpush1.msra.mxu0 0.0
    %707 = vmatprep.subr.mxu0 0.0
    %708 = vmatpush1.msra.mxu0 0.0
    %709 = vmatprep.subr.mxu0 0.0
    %710 = vmatpush1.msra.mxu0 0.0
    %711 = vmatprep.subr.mxu0 0.0
    %712 = vmatpush1.msra.mxu0 0.0
    %713 = vmatprep.mubr.f32.mxu0 0.0
    %714 = vmatmul.mubr.f32.gmra.mrb[0].mxu0 %v647
    %v715 = vpop.f32.mrb[0].mxu0
    %v716 = vadd.f32 %v643, %v715
    %v717 = vpop.f32.mrb[0].mxu0
    %718 = vdwg.mxu0
    %719 = vrot.lane.b32.xlu0 %v229, 112
    %v720 = vpop.permute.xlu0 %719
    %721 = vrot.lane.b32.xlu0 %v229, 80
    %v722 = vpop.permute.xlu0 %721
    %v723 = vsel %vm242, %v720, 0
    %v725 = vsel %vm242, %v722, 0
    %727 = vmatprep.subr.mxu0 0.0
    %728 = vmatpush1.xpose.msra.mxu0 %v725
    %729 = vmatprep.subr.mxu0 0.0
    %730 = vmatpush1.xpose.msra.mxu0 0.0
    %731 = vmatprep.subr.mxu0 0.0
    %732 = vmatpush1.xpose.msra.mxu0 0.0
    %733 = vmatprep.subr.mxu0 0.0
    %734 = vmatpush1.xpose.msra.mxu0 0.0
    %735 = vmatprep.subr.mxu0 0.0
    %736 = vmatpush1.xpose.msra.mxu0 0.0
    %737 = vmatprep.subr.mxu0 0.0
    %738 = vmatpush1.xpose.msra.mxu0 0.0
    %739 = vmatprep.subr.mxu0 0.0
    %740 = vmatpush1.xpose.msra.mxu0 0.0
    %741 = vmatprep.subr.mxu0 0.0
    %742 = vmatpush1.xpose.msra.mxu0 0.0
    %743 = vmatprep.subr.mxu0 0.0
    %744 = vmatpush1.xpose.msra.mxu0 0.0
    %745 = vmatprep.subr.mxu0 0.0
    %746 = vmatpush1.xpose.msra.mxu0 0.0
    %747 = vmatprep.subr.mxu0 0.0
    %748 = vmatpush1.xpose.msra.mxu0 0.0
    %749 = vmatprep.subr.mxu0 0.0
    %750 = vmatpush1.xpose.msra.mxu0 0.0
    %751 = vmatprep.subr.mxu0 0.0
    %752 = vmatpush1.xpose.msra.mxu0 0.0
    %753 = vmatprep.subr.mxu0 0.0
    %754 = vmatpush1.xpose.msra.mxu0 0.0
    %755 = vmatprep.subr.mxu0 0.0
    %756 = vmatpush1.xpose.msra.mxu0 0.0
    %757 = vmatprep.subr.mxu0 0.0
    %758 = vmatpush1.xpose.msra.mxu0 0.0
    %759 = vmatprep.subr.mxu0 0.0
    %760 = vmatpush1.xpose.msra.mxu0 0.0
    %761 = vmatprep.subr.mxu0 0.0
    %762 = vmatpush1.xpose.msra.mxu0 0.0
    %763 = vmatprep.subr.mxu0 0.0
    %764 = vmatpush1.xpose.msra.mxu0 0.0
    %765 = vmatprep.subr.mxu0 0.0
    %766 = vmatpush1.xpose.msra.mxu0 0.0
    %767 = vmatprep.subr.mxu0 0.0
    %768 = vmatpush1.xpose.msra.mxu0 0.0
    %769 = vmatprep.subr.mxu0 0.0
    %770 = vmatpush1.xpose.msra.mxu0 0.0
    %771 = vmatprep.subr.mxu0 0.0
    %772 = vmatpush1.xpose.msra.mxu0 0.0
    %773 = vmatprep.subr.mxu0 0.0
    %774 = vmatpush1.xpose.msra.mxu0 0.0
    %775 = vmatprep.subr.mxu0 0.0
    %776 = vmatpush1.xpose.msra.mxu0 0.0
    %777 = vmatprep.subr.mxu0 0.0
    %778 = vmatpush1.xpose.msra.mxu0 0.0
    %779 = vmatprep.subr.mxu0 0.0
    %780 = vmatpush1.xpose.msra.mxu0 0.0
    %781 = vmatprep.subr.mxu0 0.0
    %782 = vmatpush1.xpose.msra.mxu0 0.0
    %783 = vmatprep.subr.mxu0 0.0
    %784 = vmatpush1.xpose.msra.mxu0 0.0
    %785 = vmatprep.subr.mxu0 0.0
    %786 = vmatpush1.xpose.msra.mxu0 0.0
    %787 = vmatprep.subr.mxu0 0.0
    %788 = vmatpush1.xpose.msra.mxu0 0.0
    %789 = vmatprep.subr.mxu0 0.0
    %790 = vmatpush1.xpose.msra.mxu0 0.0
    %791 = vmatprep.mubr.f32.mxu0 0.0
    %792 = vmatmul.mubr.f32.gmra.mrb[0].mxu0 %v723
    %v793 = vpop.f32.mrb[0].mxu0
    %v794 = vadd.f32 0.0, %v793
    %v795 = vpop.f32.mrb[0].mxu0
    %796 = vdwg.mxu0
    %v797 = vsel %vm238, -1e+09, %v794
    %v798 = vsel %vm242, %v797, -inf
    %799 = vmax.xlane.f32.xlu0 %v798
    %v800 = vpop.xlane.xlu0 %799
    %v801 = vsub.f32 %v797, %v800
    %v802 = vmul.f32 %v801, 1.442695
    %v803 = vpow.pop %v802
    %v804 = vsel %vm242, %v803, 0.0
    %805 = vadd.xlane.f32.xlu0 %v804
    %v806 = vpop.xlane.xlu0 %805
    %v807 = vrcp.pop %v806
    %v808 = vmul.f32 %v803, %v807
    %809 = vrot.lane.b32.xlu0 %v229, 48
    %v810 = vpop.permute.xlu0 %809
    %v813 = vsel %vm242, %v808, 0
    %815 = vmatprep.subr.mxu0 0.0
    %816 = vmatpush1.msra.mxu0 %v810
    %817 = vmatprep.subr.mxu0 0.0
    %818 = vmatpush1.msra.mxu0 0.0
    %819 = vmatprep.subr.mxu0 0.0
    %820 = vmatpush1.msra.mxu0 0.0
    %821 = vmatprep.subr.mxu0 0.0
    %822 = vmatpush1.msra.mxu0 0.0
    %823 = vmatprep.subr.mxu0 0.0
    %824 = vmatpush1.msra.mxu0 0.0
    %825 = vmatprep.subr.mxu0 0.0
    %826 = vmatpush1.msra.mxu0 0.0
    %827 = vmatprep.subr.mxu0 0.0
    %828 = vmatpush1.msra.mxu0 0.0
    %829 = vmatprep.subr.mxu0 0.0
    %830 = vmatpush1.msra.mxu0 0.0
    %831 = vmatprep.subr.mxu0 0.0
    %832 = vmatpush1.msra.mxu0 0.0
    %833 = vmatprep.subr.mxu0 0.0
    %834 = vmatpush1.msra.mxu0 0.0
    %835 = vmatprep.subr.mxu0 0.0
    %836 = vmatpush1.msra.mxu0 0.0
    %837 = vmatprep.subr.mxu0 0.0
    %838 = vmatpush1.msra.mxu0 0.0
    %839 = vmatprep.subr.mxu0 0.0
    %840 = vmatpush1.msra.mxu0 0.0
    %841 = vmatprep.subr.mxu0 0.0
    %842 = vmatpush1.msra.mxu0 0.0
    %843 = vmatprep.subr.mxu0 0.0
    %844 = vmatpush1.msra.mxu0 0.0
    %845 = vmatprep.subr.mxu0 0.0
    %846 = vmatpush1.msra.mxu0 0.0
    %847 = vmatprep.subr.mxu0 0.0
    %848 = vmatpush1.msra.mxu0 0.0
    %849 = vmatprep.subr.mxu0 0.0
    %850 = vmatpush1.msra.mxu0 0.0
    %851 = vmatprep.subr.mxu0 0.0
    %852 = vmatpush1.msra.mxu0 0.0
    %853 = vmatprep.subr.mxu0 0.0
    %854 = vmatpush1.msra.mxu0 0.0
    %855 = vmatprep.subr.mxu0 0.0
    %856 = vmatpush1.msra.mxu0 0.0
    %857 = vmatprep.subr.mxu0 0.0
    %858 = vmatpush1.msra.mxu0 0.0
    %859 = vmatprep.subr.mxu0 0.0
    %860 = vmatpush1.msra.mxu0 0.0
    %861 = vmatprep.subr.mxu0 0.0
    %862 = vmatpush1.msra.mxu0 0.0
    %863 = vmatprep.subr.mxu0 0.0
    %864 = vmatpush1.msra.mxu0 0.0
    %865 = vmatprep.subr.mxu0 0.0
    %866 = vmatpush1.msra.mxu0 0.0
    %867 = vmatprep.subr.mxu0 0.0
    %868 = vmatpush1.msra.mxu0 0.0
    %869 = vmatprep.subr.mxu0 0.0
    %870 = vmatpush1.msra.mxu0 0.0
    %871 = vmatprep.subr.mxu0 0.0
    %872 = vmatpush1.msra.mxu0 0.0
    %873 = vmatprep.subr.mxu0 0.0
    %874 = vmatpush1.msra.mxu0 0.0
    %875 = vmatprep.subr.mxu0 0.0
    %876 = vmatpush1.msra.mxu0 0.0
    %877 = vmatprep.subr.mxu0 0.0
    %878 = vmatpush1.msra.mxu0 0.0
    %879 = vmatprep.mubr.f32.mxu0 0.0
    %880 = vmatmul.mubr.f32.gmra.mrb[0].mxu0 %v813
    %v881 = vpop.f32.mrb[0].mxu0
    %v882 = vadd.f32 0.0, %v881
    %v883 = vpop.f32.mrb[0].mxu0
    %884 = vdwg.mxu0
    %v885 = vld [vmem:[%s5 + $0x10] sm:$0xff]
    %v887 = vsel %vm242, %v882, 0
    %889 = vmatprep.subr.mxu0 0.0
    %890 = vmatpush1.msra.mxu0 %v885
    %891 = vmatprep.subr.mxu0 0.0
    %892 = vmatpush1.msra.mxu0 0.0
    %893 = vmatprep.subr.mxu0 0.0
    %894 = vmatpush1.msra.mxu0 0.0
    %895 = vmatprep.subr.mxu0 0.0
    %896 = vmatpush1.msra.mxu0 0.0
    %897 = vmatprep.subr.mxu0 0.0
    %898 = vmatpush1.msra.mxu0 0.0
    %899 = vmatprep.subr.mxu0 0.0
    %900 = vmatpush1.msra.mxu0 0.0
    %901 = vmatprep.subr.mxu0 0.0
    %902 = vmatpush1.msra.mxu0 0.0
    %903 = vmatprep.subr.mxu0 0.0
    %904 = vmatpush1.msra.mxu0 0.0
    %905 = vmatprep.subr.mxu0 0.0
    %906 = vmatpush1.msra.mxu0 0.0
    %907 = vmatprep.subr.mxu0 0.0
    %908 = vmatpush1.msra.mxu0 0.0
    %909 = vmatprep.subr.mxu0 0.0
    %910 = vmatpush1.msra.mxu0 0.0
    %911 = vmatprep.subr.mxu0 0.0
    %912 = vmatpush1.msra.mxu0 0.0
    %913 = vmatprep.subr.mxu0 0.0
    %914 = vmatpush1.msra.mxu0 0.0
    %915 = vmatprep.subr.mxu0 0.0
    %916 = vmatpush1.msra.mxu0 0.0
    %917 = vmatprep.subr.mxu0 0.0
    %918 = vmatpush1.msra.mxu0 0.0
    %919 = vmatprep.subr.mxu0 0.0
    %920 = vmatpush1.msra.mxu0 0.0
    %921 = vmatprep.subr.mxu0 0.0
    %922 = vmatpush1.msra.mxu0 0.0
    %923 = vmatprep.subr.mxu0 0.0
    %924 = vmatpush1.msra.mxu0 0.0
    %925 = vmatprep.subr.mxu0 0.0
    %926 = vmatpush1.msra.mxu0 0.0
    %927 = vmatprep.subr.mxu0 0.0
    %928 = vmatpush1.msra.mxu0 0.0
    %929 = vmatprep.subr.mxu0 0.0
    %930 = vmatpush1.msra.mxu0 0.0
    %931 = vmatprep.subr.mxu0 0.0
    %932 = vmatpush1.msra.mxu0 0.0
    %933 = vmatprep.subr.mxu0 0.0
    %934 = vmatpush1.msra.mxu0 0.0
    %935 = vmatprep.subr.mxu0 0.0
    %936 = vmatpush1.msra.mxu0 0.0
    %937 = vmatprep.subr.mxu0 0.0
    %938 = vmatpush1.msra.mxu0 0.0
    %939 = vmatprep.subr.mxu0 0.0
    %940 = vmatpush1.msra.mxu0 0.0
    %941 = vmatprep.subr.mxu0 0.0
    %942 = vmatpush1.msra.mxu0 0.0
    %943 = vmatprep.subr.mxu0 0.0
    %944 = vmatpush1.msra.mxu0 0.0
    %945 = vmatprep.subr.mxu0 0.0
    %946 = vmatpush1.msra.mxu0 0.0
    %947 = vmatprep.subr.mxu0 0.0
    %948 = vmatpush1.msra.mxu0 0.0
    %949 = vmatprep.subr.mxu0 0.0
    %950 = vmatpush1.msra.mxu0 0.0
    %951 = vmatprep.subr.mxu0 0.0
    %952 = vmatpush1.msra.mxu0 0.0
    %953 = vmatprep.mubr.f32.mxu0 0.0
    %954 = vmatmul.mubr.f32.gmra.mrb[0].mxu0 %v887
    %v955 = vpop.f32.mrb[0].mxu0
    %v956 = vadd.f32 0.0, %v955
    %v957 = vpop.f32.mrb[0].mxu0
    %958 = vdwg.mxu0
    %v959 = vadd.f32 %v716, %v956
    %960 = vrot.lane.b32.xlu0 %v229, 104
    %v961 = vpop.permute.xlu0 %960
    %962 = vrot.lane.b32.xlu0 %v229, 72
    %v963 = vpop.permute.xlu0 %962
    %v964 = vsel %vm242, %v961, 0
    %v966 = vsel %vm242, %v963, 0
    %968 = vmatprep.subr.mxu0 0.0
    %969 = vmatpush1.xpose.msra.mxu0 %v966
    %970 = vmatprep.subr.mxu0 0.0
    %971 = vmatpush1.xpose.msra.mxu0 0.0
    %972 = vmatprep.subr.mxu0 0.0
    %973 = vmatpush1.xpose.msra.mxu0 0.0
    %974 = vmatprep.subr.mxu0 0.0
    %975 = vmatpush1.xpose.msra.mxu0 0.0
    %976 = vmatprep.subr.mxu0 0.0
    %977 = vmatpush1.xpose.msra.mxu0 0.0
    %978 = vmatprep.subr.mxu0 0.0
    %979 = vmatpush1.xpose.msra.mxu0 0.0
    %980 = vmatprep.subr.mxu0 0.0
    %981 = vmatpush1.xpose.msra.mxu0 0.0
    %982 = vmatprep.subr.mxu0 0.0
    %983 = vmatpush1.xpose.msra.mxu0 0.0
    %984 = vmatprep.subr.mxu0 0.0
    %985 = vmatpush1.xpose.msra.mxu0 0.0
    %986 = vmatprep.subr.mxu0 0.0
    %987 = vmatpush1.xpose.msra.mxu0 0.0
    %988 = vmatprep.subr.mxu0 0.0
    %989 = vmatpush1.xpose.msra.mxu0 0.0
    %990 = vmatprep.subr.mxu0 0.0
    %991 = vmatpush1.xpose.msra.mxu0 0.0
    %992 = vmatprep.subr.mxu0 0.0
    %993 = vmatpush1.xpose.msra.mxu0 0.0
    %994 = vmatprep.subr.mxu0 0.0
    %995 = vmatpush1.xpose.msra.mxu0 0.0
    %996 = vmatprep.subr.mxu0 0.0
    %997 = vmatpush1.xpose.msra.mxu0 0.0
    %998 = vmatprep.subr.mxu0 0.0
    %999 = vmatpush1.xpose.msra.mxu0 0.0
    %1000 = vmatprep.subr.mxu0 0.0
    %1001 = vmatpush1.xpose.msra.mxu0 0.0
    %1002 = vmatprep.subr.mxu0 0.0
    %1003 = vmatpush1.xpose.msra.mxu0 0.0
    %1004 = vmatprep.subr.mxu0 0.0
    %1005 = vmatpush1.xpose.msra.mxu0 0.0
    %1006 = vmatprep.subr.mxu0 0.0
    %1007 = vmatpush1.xpose.msra.mxu0 0.0
    %1008 = vmatprep.subr.mxu0 0.0
    %1009 = vmatpush1.xpose.msra.mxu0 0.0
    %1010 = vmatprep.subr.mxu0 0.0
    %1011 = vmatpush1.xpose.msra.mxu0 0.0
    %1012 = vmatprep.subr.mxu0 0.0
    %1013 = vmatpush1.xpose.msra.mxu0 0.0
    %1014 = vmatprep.subr.mxu0 0.0
    %1015 = vmatpush1.xpose.msra.mxu0 0.0
    %1016 = vmatprep.subr.mxu0 0.0
    %1017 = vmatpush1.xpose.msra.mxu0 0.0
    %1018 = vmatprep.subr.mxu0 0.0
    %1019 = vmatpush1.xpose.msra.mxu0 0.0
    %1020 = vmatprep.subr.mxu0 0.0
    %1021 = vmatpush1.xpose.msra.mxu0 0.0
    %1022 = vmatprep.subr.mxu0 0.0
    %1023 = vmatpush1.xpose.msra.mxu0 0.0
    %1024 = vmatprep.subr.mxu0 0.0
    %1025 = vmatpush1.xpose.msra.mxu0 0.0
    %1026 = vmatprep.subr.mxu0 0.0
    %1027 = vmatpush1.xpose.msra.mxu0 0.0
    %1028 = vmatprep.subr.mxu0 0.0
    %1029 = vmatpush1.xpose.msra.mxu0 0.0
    %1030 = vmatprep.subr.mxu0 0.0
    %1031 = vmatpush1.xpose.msra.mxu0 0.0
    %1032 = vmatprep.mubr.f32.mxu0 0.0
    %1033 = vmatmul.mubr.f32.gmra.mrb[0].mxu0 %v964
    %v1034 = vpop.f32.mrb[0].mxu0
    %v1035 = vadd.f32 0.0, %v1034
    %v1036 = vpop.f32.mrb[0].mxu0
    %1037 = vdwg.mxu0
    %v1038 = vsel %vm238, -1e+09, %v1035
    %v1039 = vsel %vm242, %v1038, -inf
    %1040 = vmax.xlane.f32.xlu0 %v1039
    %v1041 = vpop.xlane.xlu0 %1040
    %v1042 = vsub.f32 %v1038, %v1041
    %v1043 = vmul.f32 %v1042, 1.442695
    %v1044 = vpow.pop %v1043
    %v1045 = vsel %vm242, %v1044, 0.0
    %1046 = vadd.xlane.f32.xlu0 %v1045
    %v1047 = vpop.xlane.xlu0 %1046
    %v1048 = vrcp.pop %v1047
    %v1049 = vmul.f32 %v1044, %v1048
    %1050 = vrot.lane.b32.xlu0 %v229, 40
    %v1051 = vpop.permute.xlu0 %1050
    %v1054 = vsel %vm242, %v1049, 0
    %1056 = vmatprep.subr.mxu0 0.0
    %1057 = vmatpush1.msra.mxu0 %v1051
    %1058 = vmatprep.subr.mxu0 0.0
    %1059 = vmatpush1.msra.mxu0 0.0
    %1060 = vmatprep.subr.mxu0 0.0
    %1061 = vmatpush1.msra.mxu0 0.0
    %1062 = vmatprep.subr.mxu0 0.0
    %1063 = vmatpush1.msra.mxu0 0.0
    %1064 = vmatprep.subr.mxu0 0.0
    %1065 = vmatpush1.msra.mxu0 0.0
    %1066 = vmatprep.subr.mxu0 0.0
    %1067 = vmatpush1.msra.mxu0 0.0
    %1068 = vmatprep.subr.mxu0 0.0
    %1069 = vmatpush1.msra.mxu0 0.0
    %1070 = vmatprep.subr.mxu0 0.0
    %1071 = vmatpush1.msra.mxu0 0.0
    %1072 = vmatprep.subr.mxu0 0.0
    %1073 = vmatpush1.msra.mxu0 0.0
    %1074 = vmatprep.subr.mxu0 0.0
    %1075 = vmatpush1.msra.mxu0 0.0
    %1076 = vmatprep.subr.mxu0 0.0
    %1077 = vmatpush1.msra.mxu0 0.0
    %1078 = vmatprep.subr.mxu0 0.0
    %1079 = vmatpush1.msra.mxu0 0.0
    %1080 = vmatprep.subr.mxu0 0.0
    %1081 = vmatpush1.msra.mxu0 0.0
    %1082 = vmatprep.subr.mxu0 0.0
    %1083 = vmatpush1.msra.mxu0 0.0
    %1084 = vmatprep.subr.mxu0 0.0
    %1085 = vmatpush1.msra.mxu0 0.0
    %1086 = vmatprep.subr.mxu0 0.0
    %1087 = vmatpush1.msra.mxu0 0.0
    %1088 = vmatprep.subr.mxu0 0.0
    %1089 = vmatpush1.msra.mxu0 0.0
    %1090 = vmatprep.subr.mxu0 0.0
    %1091 = vmatpush1.msra.mxu0 0.0
    %1092 = vmatprep.subr.mxu0 0.0
    %1093 = vmatpush1.msra.mxu0 0.0
    %1094 = vmatprep.subr.mxu0 0.0
    %1095 = vmatpush1.msra.mxu0 0.0
    %1096 = vmatprep.subr.mxu0 0.0
    %1097 = vmatpush1.msra.mxu0 0.0
    %1098 = vmatprep.subr.mxu0 0.0
    %1099 = vmatpush1.msra.mxu0 0.0
    %1100 = vmatprep.subr.mxu0 0.0
    %1101 = vmatpush1.msra.mxu0 0.0
    %1102 = vmatprep.subr.mxu0 0.0
    %1103 = vmatpush1.msra.mxu0 0.0
    %1104 = vmatprep.subr.mxu0 0.0
    %1105 = vmatpush1.msra.mxu0 0.0
    %1106 = vmatprep.subr.mxu0 0.0
    %1107 = vmatpush1.msra.mxu0 0.0
    %1108 = vmatprep.subr.mxu0 0.0
    %1109 = vmatpush1.msra.mxu0 0.0
    %1110 = vmatprep.subr.mxu0 0.0
    %1111 = vmatpush1.msra.mxu0 0.0
    %1112 = vmatprep.subr.mxu0 0.0
    %1113 = vmatpush1.msra.mxu0 0.0
    %1114 = vmatprep.subr.mxu0 0.0
    %1115 = vmatpush1.msra.mxu0 0.0
    %1116 = vmatprep.subr.mxu0 0.0
    %1117 = vmatpush1.msra.mxu0 0.0
    %1118 = vmatprep.subr.mxu0 0.0
    %1119 = vmatpush1.msra.mxu0 0.0
    %1120 = vmatprep.mubr.f32.mxu0 0.0
    %1121 = vmatmul.mubr.f32.gmra.mrb[0].mxu0 %v1054
    %v1122 = vpop.f32.mrb[0].mxu0
    %v1123 = vadd.f32 0.0, %v1122
    %v1124 = vpop.f32.mrb[0].mxu0
    %1125 = vdwg.mxu0
    %v1126 = vld [vmem:[%s5 + $0x18] sm:$0xff]
    %v1128 = vsel %vm242, %v1123, 0
    %1130 = vmatprep.subr.mxu0 0.0
    %1131 = vmatpush1.msra.mxu0 %v1126
    %1132 = vmatprep.subr.mxu0 0.0
    %1133 = vmatpush1.msra.mxu0 0.0
    %1134 = vmatprep.subr.mxu0 0.0
    %1135 = vmatpush1.msra.mxu0 0.0
    %1136 = vmatprep.subr.mxu0 0.0
    %1137 = vmatpush1.msra.mxu0 0.0
    %1138 = vmatprep.subr.mxu0 0.0
    %1139 = vmatpush1.msra.mxu0 0.0
    %1140 = vmatprep.subr.mxu0 0.0
    %1141 = vmatpush1.msra.mxu0 0.0
    %1142 = vmatprep.subr.mxu0 0.0
    %1143 = vmatpush1.msra.mxu0 0.0
    %1144 = vmatprep.subr.mxu0 0.0
    %1145 = vmatpush1.msra.mxu0 0.0
    %1146 = vmatprep.subr.mxu0 0.0
    %1147 = vmatpush1.msra.mxu0 0.0
    %1148 = vmatprep.subr.mxu0 0.0
    %1149 = vmatpush1.msra.mxu0 0.0
    %1150 = vmatprep.subr.mxu0 0.0
    %1151 = vmatpush1.msra.mxu0 0.0
    %1152 = vmatprep.subr.mxu0 0.0
    %1153 = vmatpush1.msra.mxu0 0.0
    %1154 = vmatprep.subr.mxu0 0.0
    %1155 = vmatpush1.msra.mxu0 0.0
    %1156 = vmatprep.subr.mxu0 0.0
    %1157 = vmatpush1.msra.mxu0 0.0
    %1158 = vmatprep.subr.mxu0 0.0
    %1159 = vmatpush1.msra.mxu0 0.0
    %1160 = vmatprep.subr.mxu0 0.0
    %1161 = vmatpush1.msra.mxu0 0.0
    %1162 = vmatprep.subr.mxu0 0.0
    %1163 = vmatpush1.msra.mxu0 0.0
    %1164 = vmatprep.subr.mxu0 0.0
    %1165 = vmatpush1.msra.mxu0 0.0
    %1166 = vmatprep.subr.mxu0 0.0
    %1167 = vmatpush1.msra.mxu0 0.0
    %1168 = vmatprep.subr.mxu0 0.0
    %1169 = vmatpush1.msra.mxu0 0.0
    %1170 = vmatprep.subr.mxu0 0.0
    %1171 = vmatpush1.msra.mxu0 0.0
    %1172 = vmatprep.subr.mxu0 0.0
    %1173 = vmatpush1.msra.mxu0 0.0
    %1174 = vmatprep.subr.mxu0 0.0
    %1175 = vmatpush1.msra.mxu0 0.0
    %1176 = vmatprep.subr.mxu0 0.0
    %1177 = vmatpush1.msra.mxu0 0.0
    %1178 = vmatprep.subr.mxu0 0.0
    %1179 = vmatpush1.msra.mxu0 0.0
    %1180 = vmatprep.subr.mxu0 0.0
    %1181 = vmatpush1.msra.mxu0 0.0
    %1182 = vmatprep.subr.mxu0 0.0
    %1183 = vmatpush1.msra.mxu0 0.0
    %1184 = vmatprep.subr.mxu0 0.0
    %1185 = vmatpush1.msra.mxu0 0.0
    %1186 = vmatprep.subr.mxu0 0.0
    %1187 = vmatpush1.msra.mxu0 0.0
    %1188 = vmatprep.subr.mxu0 0.0
    %1189 = vmatpush1.msra.mxu0 0.0
    %1190 = vmatprep.subr.mxu0 0.0
    %1191 = vmatpush1.msra.mxu0 0.0
    %1192 = vmatprep.subr.mxu0 0.0
    %1193 = vmatpush1.msra.mxu0 0.0
    %1194 = vmatprep.mubr.f32.mxu0 0.0
    %1195 = vmatmul.mubr.f32.gmra.mrb[0].mxu0 %v1128
    %v1196 = vpop.f32.mrb[0].mxu0
    %v1197 = vadd.f32 0.0, %v1196
    %v1198 = vpop.f32.mrb[0].mxu0
    %1199 = vdwg.mxu0
    %v1200 = vadd.f32 %v959, %v1197
    %s1201 = scalar_lea.vmem [#allocation7], 8
    %v1202 = vld [vmem:[%s1201] sm:$0xff]
    %vm1203 = vcmp.eq.s32.totalorder %v1202, 0
    %1205 = vrot.lane.b32.xlu0 %v234, 96
    %v1206 = vpop.permute.xlu0 %1205
    %v1207 = vsel %vm242, %v234, 0
    %v1209 = vsel %vm242, %v1206, 0
    %1211 = vmatprep.subr.mxu0 0.0
    %1212 = vmatpush1.xpose.msra.mxu0 %v1209
    %1213 = vmatprep.subr.mxu0 0.0
    %1214 = vmatpush1.xpose.msra.mxu0 0.0
    %1215 = vmatprep.subr.mxu0 0.0
    %1216 = vmatpush1.xpose.msra.mxu0 0.0
    %1217 = vmatprep.subr.mxu0 0.0
    %1218 = vmatpush1.xpose.msra.mxu0 0.0
    %1219 = vmatprep.subr.mxu0 0.0
    %1220 = vmatpush1.xpose.msra.mxu0 0.0
    %1221 = vmatprep.subr.mxu0 0.0
    %1222 = vmatpush1.xpose.msra.mxu0 0.0
    %1223 = vmatprep.subr.mxu0 0.0
    %1224 = vmatpush1.xpose.msra.mxu0 0.0
    %1225 = vmatprep.subr.mxu0 0.0
    %1226 = vmatpush1.xpose.msra.mxu0 0.0
    %1227 = vmatprep.subr.mxu0 0.0
    %1228 = vmatpush1.xpose.msra.mxu0 0.0
    %1229 = vmatprep.subr.mxu0 0.0
    %1230 = vmatpush1.xpose.msra.mxu0 0.0
    %1231 = vmatprep.subr.mxu0 0.0
    %1232 = vmatpush1.xpose.msra.mxu0 0.0
    %1233 = vmatprep.subr.mxu0 0.0
    %1234 = vmatpush1.xpose.msra.mxu0 0.0
    %1235 = vmatprep.subr.mxu0 0.0
    %1236 = vmatpush1.xpose.msra.mxu0 0.0
    %1237 = vmatprep.subr.mxu0 0.0
    %1238 = vmatpush1.xpose.msra.mxu0 0.0
    %1239 = vmatprep.subr.mxu0 0.0
    %1240 = vmatpush1.xpose.msra.mxu0 0.0
    %1241 = vmatprep.subr.mxu0 0.0
    %1242 = vmatpush1.xpose.msra.mxu0 0.0
    %1243 = vmatprep.subr.mxu0 0.0
    %1244 = vmatpush1.xpose.msra.mxu0 0.0
    %1245 = vmatprep.subr.mxu0 0.0
    %1246 = vmatpush1.xpose.msra.mxu0 0.0
    %1247 = vmatprep.subr.mxu0 0.0
    %1248 = vmatpush1.xpose.msra.mxu0 0.0
    %1249 = vmatprep.subr.mxu0 0.0
    %1250 = vmatpush1.xpose.msra.mxu0 0.0
    %1251 = vmatprep.subr.mxu0 0.0
    %1252 = vmatpush1.xpose.msra.mxu0 0.0
    %1253 = vmatprep.subr.mxu0 0.0
    %1254 = vmatpush1.xpose.msra.mxu0 0.0
    %1255 = vmatprep.subr.mxu0 0.0
    %1256 = vmatpush1.xpose.msra.mxu0 0.0
    %1257 = vmatprep.subr.mxu0 0.0
    %1258 = vmatpush1.xpose.msra.mxu0 0.0
    %1259 = vmatprep.subr.mxu0 0.0
    %1260 = vmatpush1.xpose.msra.mxu0 0.0
    %1261 = vmatprep.subr.mxu0 0.0
    %1262 = vmatpush1.xpose.msra.mxu0 0.0
    %1263 = vmatprep.subr.mxu0 0.0
    %1264 = vmatpush1.xpose.msra.mxu0 0.0
    %1265 = vmatprep.subr.mxu0 0.0
    %1266 = vmatpush1.xpose.msra.mxu0 0.0
    %1267 = vmatprep.subr.mxu0 0.0
    %1268 = vmatpush1.xpose.msra.mxu0 0.0
    %1269 = vmatprep.subr.mxu0 0.0
    %1270 = vmatpush1.xpose.msra.mxu0 0.0
    %1271 = vmatprep.subr.mxu0 0.0
    %1272 = vmatpush1.xpose.msra.mxu0 0.0
    %1273 = vmatprep.subr.mxu0 0.0
    %1274 = vmatpush1.xpose.msra.mxu0 0.0
    %1275 = vmatprep.mubr.f32.mxu0 0.0
    %1276 = vmatmul.mubr.f32.gmra.mrb[0].mxu0 %v1207
    %v1277 = vpop.f32.mrb[0].mxu0
    %v1278 = vadd.f32 0.0, %v1277
    %v1279 = vpop.f32.mrb[0].mxu0
    %1280 = vdwg.mxu0
    %v1281 = vsel %vm1203, -1e+09, %v1278
    %v1282 = vsel %vm242, %v1281, -inf
    %1283 = vmax.xlane.f32.xlu0 %v1282
    %v1284 = vpop.xlane.xlu0 %1283
    %v1285 = vsub.f32 %v1281, %v1284
    %v1286 = vmul.f32 %v1285, 1.442695
    %v1287 = vpow.pop %v1286
    %v1288 = vsel %vm242, %v1287, 0.0
    %1289 = vadd.xlane.f32.xlu0 %v1288
    %v1290 = vpop.xlane.xlu0 %1289
    %v1291 = vrcp.pop %v1290
    %v1292 = vmul.f32 %v1287, %v1291
    %1293 = vrot.lane.b32.xlu0 %v234, 64
    %v1294 = vpop.permute.xlu0 %1293
    %v1297 = vsel %vm242, %v1292, 0
    %1299 = vmatprep.subr.mxu0 0.0
    %1300 = vmatpush1.msra.mxu0 %v1294
    %1301 = vmatprep.subr.mxu0 0.0
    %1302 = vmatpush1.msra.mxu0 0.0
    %1303 = vmatprep.subr.mxu0 0.0
    %1304 = vmatpush1.msra.mxu0 0.0
    %1305 = vmatprep.subr.mxu0 0.0
    %1306 = vmatpush1.msra.mxu0 0.0
    %1307 = vmatprep.subr.mxu0 0.0
    %1308 = vmatpush1.msra.mxu0 0.0
    %1309 = vmatprep.subr.mxu0 0.0
    %1310 = vmatpush1.msra.mxu0 0.0
    %1311 = vmatprep.subr.mxu0 0.0
    %1312 = vmatpush1.msra.mxu0 0.0
    %1313 = vmatprep.subr.mxu0 0.0
    %1314 = vmatpush1.msra.mxu0 0.0
    %1315 = vmatprep.subr.mxu0 0.0
    %1316 = vmatpush1.msra.mxu0 0.0
    %1317 = vmatprep.subr.mxu0 0.0
    %1318 = vmatpush1.msra.mxu0 0.0
    %1319 = vmatprep.subr.mxu0 0.0
    %1320 = vmatpush1.msra.mxu0 0.0
    %1321 = vmatprep.subr.mxu0 0.0
    %1322 = vmatpush1.msra.mxu0 0.0
    %1323 = vmatprep.subr.mxu0 0.0
    %1324 = vmatpush1.msra.mxu0 0.0
    %1325 = vmatprep.subr.mxu0 0.0
    %1326 = vmatpush1.msra.mxu0 0.0
    %1327 = vmatprep.subr.mxu0 0.0
    %1328 = vmatpush1.msra.mxu0 0.0
    %1329 = vmatprep.subr.mxu0 0.0
    %1330 = vmatpush1.msra.mxu0 0.0
    %1331 = vmatprep.subr.mxu0 0.0
    %1332 = vmatpush1.msra.mxu0 0.0
    %1333 = vmatprep.subr.mxu0 0.0
    %1334 = vmatpush1.msra.mxu0 0.0
    %1335 = vmatprep.subr.mxu0 0.0
    %1336 = vmatpush1.msra.mxu0 0.0
    %1337 = vmatprep.subr.mxu0 0.0
    %1338 = vmatpush1.msra.mxu0 0.0
    %1339 = vmatprep.subr.mxu0 0.0
    %1340 = vmatpush1.msra.mxu0 0.0
    %1341 = vmatprep.subr.mxu0 0.0
    %1342 = vmatpush1.msra.mxu0 0.0
    %1343 = vmatprep.subr.mxu0 0.0
    %1344 = vmatpush1.msra.mxu0 0.0
    %1345 = vmatprep.subr.mxu0 0.0
    %1346 = vmatpush1.msra.mxu0 0.0
    %1347 = vmatprep.subr.mxu0 0.0
    %1348 = vmatpush1.msra.mxu0 0.0
    %1349 = vmatprep.subr.mxu0 0.0
    %1350 = vmatpush1.msra.mxu0 0.0
    %1351 = vmatprep.subr.mxu0 0.0
    %1352 = vmatpush1.msra.mxu0 0.0
    %1353 = vmatprep.subr.mxu0 0.0
    %1354 = vmatpush1.msra.mxu0 0.0
    %1355 = vmatprep.subr.mxu0 0.0
    %1356 = vmatpush1.msra.mxu0 0.0
    %1357 = vmatprep.subr.mxu0 0.0
    %1358 = vmatpush1.msra.mxu0 0.0
    %1359 = vmatprep.subr.mxu0 0.0
    %1360 = vmatpush1.msra.mxu0 0.0
    %1361 = vmatprep.subr.mxu0 0.0
    %1362 = vmatpush1.msra.mxu0 0.0
    %1363 = vmatprep.mubr.f32.mxu0 0.0
    %1364 = vmatmul.mubr.f32.gmra.mrb[0].mxu0 %v1297
    %v1365 = vpop.f32.mrb[0].mxu0
    %v1366 = vadd.f32 0.0, %v1365
    %v1367 = vpop.f32.mrb[0].mxu0
    %1368 = vdwg.mxu0
    %1369 = vrot.lane.b32.xlu0 %v234, 120
    %v1370 = vpop.permute.xlu0 %1369
    %1371 = vrot.lane.b32.xlu0 %v234, 88
    %v1372 = vpop.permute.xlu0 %1371
    %v1373 = vsel %vm242, %v1370, 0
    %v1375 = vsel %vm242, %v1372, 0
    %1377 = vmatprep.subr.mxu0 0.0
    %1378 = vmatpush1.xpose.msra.mxu0 %v1375
    %1379 = vmatprep.subr.mxu0 0.0
    %1380 = vmatpush1.xpose.msra.mxu0 0.0
    %1381 = vmatprep.subr.mxu0 0.0
    %1382 = vmatpush1.xpose.msra.mxu0 0.0
    %1383 = vmatprep.subr.mxu0 0.0
    %1384 = vmatpush1.xpose.msra.mxu0 0.0
    %1385 = vmatprep.subr.mxu0 0.0
    %1386 = vmatpush1.xpose.msra.mxu0 0.0
    %1387 = vmatprep.subr.mxu0 0.0
    %1388 = vmatpush1.xpose.msra.mxu0 0.0
    %1389 = vmatprep.subr.mxu0 0.0
    %1390 = vmatpush1.xpose.msra.mxu0 0.0
    %1391 = vmatprep.subr.mxu0 0.0
    %1392 = vmatpush1.xpose.msra.mxu0 0.0
    %1393 = vmatprep.subr.mxu0 0.0
    %1394 = vmatpush1.xpose.msra.mxu0 0.0
    %1395 = vmatprep.subr.mxu0 0.0
    %1396 = vmatpush1.xpose.msra.mxu0 0.0
    %1397 = vmatprep.subr.mxu0 0.0
    %1398 = vmatpush1.xpose.msra.mxu0 0.0
    %1399 = vmatprep.subr.mxu0 0.0
    %1400 = vmatpush1.xpose.msra.mxu0 0.0
    %1401 = vmatprep.subr.mxu0 0.0
    %1402 = vmatpush1.xpose.msra.mxu0 0.0
    %1403 = vmatprep.subr.mxu0 0.0
    %1404 = vmatpush1.xpose.msra.mxu0 0.0
    %1405 = vmatprep.subr.mxu0 0.0
    %1406 = vmatpush1.xpose.msra.mxu0 0.0
    %1407 = vmatprep.subr.mxu0 0.0
    %1408 = vmatpush1.xpose.msra.mxu0 0.0
    %1409 = vmatprep.subr.mxu0 0.0
    %1410 = vmatpush1.xpose.msra.mxu0 0.0
    %1411 = vmatprep.subr.mxu0 0.0
    %1412 = vmatpush1.xpose.msra.mxu0 0.0
    %1413 = vmatprep.subr.mxu0 0.0
    %1414 = vmatpush1.xpose.msra.mxu0 0.0
    %1415 = vmatprep.subr.mxu0 0.0
    %1416 = vmatpush1.xpose.msra.mxu0 0.0
    %1417 = vmatprep.subr.mxu0 0.0
    %1418 = vmatpush1.xpose.msra.mxu0 0.0
    %1419 = vmatprep.subr.mxu0 0.0
    %1420 = vmatpush1.xpose.msra.mxu0 0.0
    %1421 = vmatprep.subr.mxu0 0.0
    %1422 = vmatpush1.xpose.msra.mxu0 0.0
    %1423 = vmatprep.subr.mxu0 0.0
    %1424 = vmatpush1.xpose.msra.mxu0 0.0
    %1425 = vmatprep.subr.mxu0 0.0
    %1426 = vmatpush1.xpose.msra.mxu0 0.0
    %1427 = vmatprep.subr.mxu0 0.0
    %1428 = vmatpush1.xpose.msra.mxu0 0.0
    %1429 = vmatprep.subr.mxu0 0.0
    %1430 = vmatpush1.xpose.msra.mxu0 0.0
    %1431 = vmatprep.subr.mxu0 0.0
    %1432 = vmatpush1.xpose.msra.mxu0 0.0
    %1433 = vmatprep.subr.mxu0 0.0
    %1434 = vmatpush1.xpose.msra.mxu0 0.0
    %1435 = vmatprep.subr.mxu0 0.0
    %1436 = vmatpush1.xpose.msra.mxu0 0.0
    %1437 = vmatprep.subr.mxu0 0.0
    %1438 = vmatpush1.xpose.msra.mxu0 0.0
    %1439 = vmatprep.subr.mxu0 0.0
    %1440 = vmatpush1.xpose.msra.mxu0 0.0
    %1441 = vmatprep.mubr.f32.mxu0 0.0
    %1442 = vmatmul.mubr.f32.gmra.mrb[0].mxu0 %v1373
    %v1443 = vpop.f32.mrb[0].mxu0
    %v1444 = vadd.f32 0.0, %v1443
    %v1445 = vpop.f32.mrb[0].mxu0
    %1446 = vdwg.mxu0
    %v1447 = vsel %vm1203, -1e+09, %v1444
    %v1448 = vsel %vm242, %v1447, -inf
    %1449 = vmax.xlane.f32.xlu0 %v1448
    %v1450 = vpop.xlane.xlu0 %1449
    %v1451 = vsub.f32 %v1447, %v1450
    %v1452 = vmul.f32 %v1451, 1.442695
    %v1453 = vpow.pop %v1452
    %v1454 = vsel %vm242, %v1453, 0.0
    %1455 = vadd.xlane.f32.xlu0 %v1454
    %v1456 = vpop.xlane.xlu0 %1455
    %v1457 = vrcp.pop %v1456
    %v1458 = vmul.f32 %v1453, %v1457
    %1459 = vrot.lane.b32.xlu0 %v234, 56
    %v1460 = vpop.permute.xlu0 %1459
    %v1463 = vsel %vm242, %v1458, 0
    %1465 = vmatprep.subr.mxu0 0.0
    %1466 = vmatpush1.msra.mxu0 %v1460
    %1467 = vmatprep.subr.mxu0 0.0
    %1468 = vmatpush1.msra.mxu0 0.0
    %1469 = vmatprep.subr.mxu0 0.0
    %1470 = vmatpush1.msra.mxu0 0.0
    %1471 = vmatprep.subr.mxu0 0.0
    %1472 = vmatpush1.msra.mxu0 0.0
    %1473 = vmatprep.subr.mxu0 0.0
    %1474 = vmatpush1.msra.mxu0 0.0
    %1475 = vmatprep.subr.mxu0 0.0
    %1476 = vmatpush1.msra.mxu0 0.0
    %1477 = vmatprep.subr.mxu0 0.0
    %1478 = vmatpush1.msra.mxu0 0.0
    %1479 = vmatprep.subr.mxu0 0.0
    %1480 = vmatpush1.msra.mxu0 0.0
    %1481 = vmatprep.subr.mxu0 0.0
    %1482 = vmatpush1.msra.mxu0 0.0
    %1483 = vmatprep.subr.mxu0 0.0
    %1484 = vmatpush1.msra.mxu0 0.0
    %1485 = vmatprep.subr.mxu0 0.0
    %1486 = vmatpush1.msra.mxu0 0.0
    %1487 = vmatprep.subr.mxu0 0.0
    %1488 = vmatpush1.msra.mxu0 0.0
    %1489 = vmatprep.subr.mxu0 0.0
    %1490 = vmatpush1.msra.mxu0 0.0
    %1491 = vmatprep.subr.mxu0 0.0
    %1492 = vmatpush1.msra.mxu0 0.0
    %1493 = vmatprep.subr.mxu0 0.0
    %1494 = vmatpush1.msra.mxu0 0.0
    %1495 = vmatprep.subr.mxu0 0.0
    %1496 = vmatpush1.msra.mxu0 0.0
    %1497 = vmatprep.subr.mxu0 0.0
    %1498 = vmatpush1.msra.mxu0 0.0
    %1499 = vmatprep.subr.mxu0 0.0
    %1500 = vmatpush1.msra.mxu0 0.0
    %1501 = vmatprep.subr.mxu0 0.0
    %1502 = vmatpush1.msra.mxu0 0.0
    %1503 = vmatprep.subr.mxu0 0.0
    %1504 = vmatpush1.msra.mxu0 0.0
    %1505 = vmatprep.subr.mxu0 0.0
    %1506 = vmatpush1.msra.mxu0 0.0
    %1507 = vmatprep.subr.mxu0 0.0
    %1508 = vmatpush1.msra.mxu0 0.0
    %1509 = vmatprep.subr.mxu0 0.0
    %1510 = vmatpush1.msra.mxu0 0.0
    %1511 = vmatprep.subr.mxu0 0.0
    %1512 = vmatpush1.msra.mxu0 0.0
    %1513 = vmatprep.subr.mxu0 0.0
    %1514 = vmatpush1.msra.mxu0 0.0
    %1515 = vmatprep.subr.mxu0 0.0
    %1516 = vmatpush1.msra.mxu0 0.0
    %1517 = vmatprep.subr.mxu0 0.0
    %1518 = vmatpush1.msra.mxu0 0.0
    %1519 = vmatprep.subr.mxu0 0.0
    %1520 = vmatpush1.msra.mxu0 0.0
    %1521 = vmatprep.subr.mxu0 0.0
    %1522 = vmatpush1.msra.mxu0 0.0
    %1523 = vmatprep.subr.mxu0 0.0
    %1524 = vmatpush1.msra.mxu0 0.0
    %1525 = vmatprep.subr.mxu0 0.0
    %1526 = vmatpush1.msra.mxu0 0.0
    %1527 = vmatprep.subr.mxu0 0.0
    %1528 = vmatpush1.msra.mxu0 0.0
    %1529 = vmatprep.mubr.f32.mxu0 0.0
    %1530 = vmatmul.mubr.f32.gmra.mrb[0].mxu0 %v1463
    %v1531 = vpop.f32.mrb[0].mxu0
    %v1532 = vadd.f32 0.0, %v1531
    %v1533 = vpop.f32.mrb[0].mxu0
    %1534 = vdwg.mxu0
    %v1536 = vsel %vm242, %v1532, 0
    %1538 = vmatprep.subr.mxu0 0.0
    %1539 = vmatpush1.msra.mxu0 %v572
    %1540 = vmatprep.subr.mxu0 0.0
    %1541 = vmatpush1.msra.mxu0 0.0
    %1542 = vmatprep.subr.mxu0 0.0
    %1543 = vmatpush1.msra.mxu0 0.0
    %1544 = vmatprep.subr.mxu0 0.0
    %1545 = vmatpush1.msra.mxu0 0.0
    %1546 = vmatprep.subr.mxu0 0.0
    %1547 = vmatpush1.msra.mxu0 0.0
    %1548 = vmatprep.subr.mxu0 0.0
    %1549 = vmatpush1.msra.mxu0 0.0
    %1550 = vmatprep.subr.mxu0 0.0
    %1551 = vmatpush1.msra.mxu0 0.0
    %1552 = vmatprep.subr.mxu0 0.0
    %1553 = vmatpush1.msra.mxu0 0.0
    %1554 = vmatprep.subr.mxu0 0.0
    %1555 = vmatpush1.msra.mxu0 0.0
    %1556 = vmatprep.subr.mxu0 0.0
    %1557 = vmatpush1.msra.mxu0 0.0
    %1558 = vmatprep.subr.mxu0 0.0
    %1559 = vmatpush1.msra.mxu0 0.0
    %1560 = vmatprep.subr.mxu0 0.0
    %1561 = vmatpush1.msra.mxu0 0.0
    %1562 = vmatprep.subr.mxu0 0.0
    %1563 = vmatpush1.msra.mxu0 0.0
    %1564 = vmatprep.subr.mxu0 0.0
    %1565 = vmatpush1.msra.mxu0 0.0
    %1566 = vmatprep.subr.mxu0 0.0
    %1567 = vmatpush1.msra.mxu0 0.0
    %1568 = vmatprep.subr.mxu0 0.0
    %1569 = vmatpush1.msra.mxu0 0.0
    %1570 = vmatprep.subr.mxu0 0.0
    %1571 = vmatpush1.msra.mxu0 0.0
    %1572 = vmatprep.subr.mxu0 0.0
    %1573 = vmatpush1.msra.mxu0 0.0
    %1574 = vmatprep.subr.mxu0 0.0
    %1575 = vmatpush1.msra.mxu0 0.0
    %1576 = vmatprep.subr.mxu0 0.0
    %1577 = vmatpush1.msra.mxu0 0.0
    %1578 = vmatprep.subr.mxu0 0.0
    %1579 = vmatpush1.msra.mxu0 0.0
    %1580 = vmatprep.subr.mxu0 0.0
    %1581 = vmatpush1.msra.mxu0 0.0
    %1582 = vmatprep.subr.mxu0 0.0
    %1583 = vmatpush1.msra.mxu0 0.0
    %1584 = vmatprep.subr.mxu0 0.0
    %1585 = vmatpush1.msra.mxu0 0.0
    %1586 = vmatprep.subr.mxu0 0.0
    %1587 = vmatpush1.msra.mxu0 0.0
    %1588 = vmatprep.subr.mxu0 0.0
    %1589 = vmatpush1.msra.mxu0 0.0
    %1590 = vmatprep.subr.mxu0 0.0
    %1591 = vmatpush1.msra.mxu0 0.0
    %1592 = vmatprep.subr.mxu0 0.0
    %1593 = vmatpush1.msra.mxu0 0.0
    %1594 = vmatprep.subr.mxu0 0.0
    %1595 = vmatpush1.msra.mxu0 0.0
    %1596 = vmatprep.subr.mxu0 0.0
    %1597 = vmatpush1.msra.mxu0 0.0
    %1598 = vmatprep.subr.mxu0 0.0
    %1599 = vmatpush1.msra.mxu0 0.0
    %1600 = vmatprep.subr.mxu0 0.0
    %1601 = vmatpush1.msra.mxu0 0.0
    %1602 = vmatprep.mubr.f32.mxu0 0.0
    %1603 = vmatmul.mubr.f32.gmra.mrb[0].mxu0 %v1536
    %v1604 = vpop.f32.mrb[0].mxu0
    %v1605 = vadd.f32 0.0, %v1604
    %v1606 = vpop.f32.mrb[0].mxu0
    %1607 = vdwg.mxu0
    %v1609 = vsel %vm242, %v1366, 0
    %1611 = vmatprep.subr.mxu0 0.0
    %1612 = vmatpush1.msra.mxu0 %v405
    %1613 = vmatprep.subr.mxu0 0.0
    %1614 = vmatpush1.msra.mxu0 0.0
    %1615 = vmatprep.subr.mxu0 0.0
    %1616 = vmatpush1.msra.mxu0 0.0
    %1617 = vmatprep.subr.mxu0 0.0
    %1618 = vmatpush1.msra.mxu0 0.0
    %1619 = vmatprep.subr.mxu0 0.0
    %1620 = vmatpush1.msra.mxu0 0.0
    %1621 = vmatprep.subr.mxu0 0.0
    %1622 = vmatpush1.msra.mxu0 0.0
    %1623 = vmatprep.subr.mxu0 0.0
    %1624 = vmatpush1.msra.mxu0 0.0
    %1625 = vmatprep.subr.mxu0 0.0
    %1626 = vmatpush1.msra.mxu0 0.0
    %1627 = vmatprep.subr.mxu0 0.0
    %1628 = vmatpush1.msra.mxu0 0.0
    %1629 = vmatprep.subr.mxu0 0.0
    %1630 = vmatpush1.msra.mxu0 0.0
    %1631 = vmatprep.subr.mxu0 0.0
    %1632 = vmatpush1.msra.mxu0 0.0
    %1633 = vmatprep.subr.mxu0 0.0
    %1634 = vmatpush1.msra.mxu0 0.0
    %1635 = vmatprep.subr.mxu0 0.0
    %1636 = vmatpush1.msra.mxu0 0.0
    %1637 = vmatprep.subr.mxu0 0.0
    %1638 = vmatpush1.msra.mxu0 0.0
    %1639 = vmatprep.subr.mxu0 0.0
    %1640 = vmatpush1.msra.mxu0 0.0
    %1641 = vmatprep.subr.mxu0 0.0
    %1642 = vmatpush1.msra.mxu0 0.0
    %1643 = vmatprep.subr.mxu0 0.0
    %1644 = vmatpush1.msra.mxu0 0.0
    %1645 = vmatprep.subr.mxu0 0.0
    %1646 = vmatpush1.msra.mxu0 0.0
    %1647 = vmatprep.subr.mxu0 0.0
    %1648 = vmatpush1.msra.mxu0 0.0
    %1649 = vmatprep.subr.mxu0 0.0
    %1650 = vmatpush1.msra.mxu0 0.0
    %1651 = vmatprep.subr.mxu0 0.0
    %1652 = vmatpush1.msra.mxu0 0.0
    %1653 = vmatprep.subr.mxu0 0.0
    %1654 = vmatpush1.msra.mxu0 0.0
    %1655 = vmatprep.subr.mxu0 0.0
    %1656 = vmatpush1.msra.mxu0 0.0
    %1657 = vmatprep.subr.mxu0 0.0
    %1658 = vmatpush1.msra.mxu0 0.0
    %1659 = vmatprep.subr.mxu0 0.0
    %1660 = vmatpush1.msra.mxu0 0.0
    %1661 = vmatprep.subr.mxu0 0.0
    %1662 = vmatpush1.msra.mxu0 0.0
    %1663 = vmatprep.subr.mxu0 0.0
    %1664 = vmatpush1.msra.mxu0 0.0
    %1665 = vmatprep.subr.mxu0 0.0
    %1666 = vmatpush1.msra.mxu0 0.0
    %1667 = vmatprep.subr.mxu0 0.0
    %1668 = vmatpush1.msra.mxu0 0.0
    %1669 = vmatprep.subr.mxu0 0.0
    %1670 = vmatpush1.msra.mxu0 0.0
    %1671 = vmatprep.subr.mxu0 0.0
    %1672 = vmatpush1.msra.mxu0 0.0
    %1673 = vmatprep.subr.mxu0 0.0
    %1674 = vmatpush1.msra.mxu0 0.0
    %1675 = vmatprep.mubr.f32.mxu0 0.0
    %1676 = vmatmul.mubr.f32.gmra.mrb[0].mxu0 %v1609
    %v1677 = vpop.f32.mrb[0].mxu0
    %v1678 = vadd.f32 %v1605, %v1677
    %v1679 = vpop.f32.mrb[0].mxu0
    %1680 = vdwg.mxu0
    %1681 = vrot.lane.b32.xlu0 %v234, 112
    %v1682 = vpop.permute.xlu0 %1681
    %1683 = vrot.lane.b32.xlu0 %v234, 80
    %v1684 = vpop.permute.xlu0 %1683
    %v1685 = vsel %vm242, %v1682, 0
    %v1687 = vsel %vm242, %v1684, 0
    %1689 = vmatprep.subr.mxu0 0.0
    %1690 = vmatpush1.xpose.msra.mxu0 %v1687
    %1691 = vmatprep.subr.mxu0 0.0
    %1692 = vmatpush1.xpose.msra.mxu0 0.0
    %1693 = vmatprep.subr.mxu0 0.0
    %1694 = vmatpush1.xpose.msra.mxu0 0.0
    %1695 = vmatprep.subr.mxu0 0.0
    %1696 = vmatpush1.xpose.msra.mxu0 0.0
    %1697 = vmatprep.subr.mxu0 0.0
    %1698 = vmatpush1.xpose.msra.mxu0 0.0
    %1699 = vmatprep.subr.mxu0 0.0
    %1700 = vmatpush1.xpose.msra.mxu0 0.0
    %1701 = vmatprep.subr.mxu0 0.0
    %1702 = vmatpush1.xpose.msra.mxu0 0.0
    %1703 = vmatprep.subr.mxu0 0.0
    %1704 = vmatpush1.xpose.msra.mxu0 0.0
    %1705 = vmatprep.subr.mxu0 0.0
    %1706 = vmatpush1.xpose.msra.mxu0 0.0
    %1707 = vmatprep.subr.mxu0 0.0
    %1708 = vmatpush1.xpose.msra.mxu0 0.0
    %1709 = vmatprep.subr.mxu0 0.0
    %1710 = vmatpush1.xpose.msra.mxu0 0.0
    %1711 = vmatprep.subr.mxu0 0.0
    %1712 = vmatpush1.xpose.msra.mxu0 0.0
    %1713 = vmatprep.subr.mxu0 0.0
    %1714 = vmatpush1.xpose.msra.mxu0 0.0
    %1715 = vmatprep.subr.mxu0 0.0
    %1716 = vmatpush1.xpose.msra.mxu0 0.0
    %1717 = vmatprep.subr.mxu0 0.0
    %1718 = vmatpush1.xpose.msra.mxu0 0.0
    %1719 = vmatprep.subr.mxu0 0.0
    %1720 = vmatpush1.xpose.msra.mxu0 0.0
    %1721 = vmatprep.subr.mxu0 0.0
    %1722 = vmatpush1.xpose.msra.mxu0 0.0
    %1723 = vmatprep.subr.mxu0 0.0
    %1724 = vmatpush1.xpose.msra.mxu0 0.0
    %1725 = vmatprep.subr.mxu0 0.0
    %1726 = vmatpush1.xpose.msra.mxu0 0.0
    %1727 = vmatprep.subr.mxu0 0.0
    %1728 = vmatpush1.xpose.msra.mxu0 0.0
    %1729 = vmatprep.subr.mxu0 0.0
    %1730 = vmatpush1.xpose.msra.mxu0 0.0
    %1731 = vmatprep.subr.mxu0 0.0
    %1732 = vmatpush1.xpose.msra.mxu0 0.0
    %1733 = vmatprep.subr.mxu0 0.0
    %1734 = vmatpush1.xpose.msra.mxu0 0.0
    %1735 = vmatprep.subr.mxu0 0.0
    %1736 = vmatpush1.xpose.msra.mxu0 0.0
    %1737 = vmatprep.subr.mxu0 0.0
    %1738 = vmatpush1.xpose.msra.mxu0 0.0
    %1739 = vmatprep.subr.mxu0 0.0
    %1740 = vmatpush1.xpose.msra.mxu0 0.0
    %1741 = vmatprep.subr.mxu0 0.0
    %1742 = vmatpush1.xpose.msra.mxu0 0.0
    %1743 = vmatprep.subr.mxu0 0.0
    %1744 = vmatpush1.xpose.msra.mxu0 0.0
    %1745 = vmatprep.subr.mxu0 0.0
    %1746 = vmatpush1.xpose.msra.mxu0 0.0
    %1747 = vmatprep.subr.mxu0 0.0
    %1748 = vmatpush1.xpose.msra.mxu0 0.0
    %1749 = vmatprep.subr.mxu0 0.0
    %1750 = vmatpush1.xpose.msra.mxu0 0.0
    %1751 = vmatprep.subr.mxu0 0.0
    %1752 = vmatpush1.xpose.msra.mxu0 0.0
    %1753 = vmatprep.mubr.f32.mxu0 0.0
    %1754 = vmatmul.mubr.f32.gmra.mrb[0].mxu0 %v1685
    %v1755 = vpop.f32.mrb[0].mxu0
    %v1756 = vadd.f32 0.0, %v1755
    %v1757 = vpop.f32.mrb[0].mxu0
    %1758 = vdwg.mxu0
    %v1759 = vsel %vm1203, -1e+09, %v1756
    %v1760 = vsel %vm242, %v1759, -inf
    %1761 = vmax.xlane.f32.xlu0 %v1760
    %v1762 = vpop.xlane.xlu0 %1761
    %v1763 = vsub.f32 %v1759, %v1762
    %v1764 = vmul.f32 %v1763, 1.442695
    %v1765 = vpow.pop %v1764
    %v1766 = vsel %vm242, %v1765, 0.0
    %1767 = vadd.xlane.f32.xlu0 %v1766
    %v1768 = vpop.xlane.xlu0 %1767
    %v1769 = vrcp.pop %v1768
    %v1770 = vmul.f32 %v1765, %v1769
    %1771 = vrot.lane.b32.xlu0 %v234, 48
    %v1772 = vpop.permute.xlu0 %1771
    %v1775 = vsel %vm242, %v1770, 0
    %1777 = vmatprep.subr.mxu0 0.0
    %1778 = vmatpush1.msra.mxu0 %v1772
    %1779 = vmatprep.subr.mxu0 0.0
    %1780 = vmatpush1.msra.mxu0 0.0
    %1781 = vmatprep.subr.mxu0 0.0
    %1782 = vmatpush1.msra.mxu0 0.0
    %1783 = vmatprep.subr.mxu0 0.0
    %1784 = vmatpush1.msra.mxu0 0.0
    %1785 = vmatprep.subr.mxu0 0.0
    %1786 = vmatpush1.msra.mxu0 0.0
    %1787 = vmatprep.subr.mxu0 0.0
    %1788 = vmatpush1.msra.mxu0 0.0
    %1789 = vmatprep.subr.mxu0 0.0
    %1790 = vmatpush1.msra.mxu0 0.0
    %1791 = vmatprep.subr.mxu0 0.0
    %1792 = vmatpush1.msra.mxu0 0.0
    %1793 = vmatprep.subr.mxu0 0.0
    %1794 = vmatpush1.msra.mxu0 0.0
    %1795 = vmatprep.subr.mxu0 0.0
    %1796 = vmatpush1.msra.mxu0 0.0
    %1797 = vmatprep.subr.mxu0 0.0
    %1798 = vmatpush1.msra.mxu0 0.0
    %1799 = vmatprep.subr.mxu0 0.0
    %1800 = vmatpush1.msra.mxu0 0.0
    %1801 = vmatprep.subr.mxu0 0.0
    %1802 = vmatpush1.msra.mxu0 0.0
    %1803 = vmatprep.subr.mxu0 0.0
    %1804 = vmatpush1.msra.mxu0 0.0
    %1805 = vmatprep.subr.mxu0 0.0
    %1806 = vmatpush1.msra.mxu0 0.0
    %1807 = vmatprep.subr.mxu0 0.0
    %1808 = vmatpush1.msra.mxu0 0.0
    %1809 = vmatprep.subr.mxu0 0.0
    %1810 = vmatpush1.msra.mxu0 0.0
    %1811 = vmatprep.subr.mxu0 0.0
    %1812 = vmatpush1.msra.mxu0 0.0
    %1813 = vmatprep.subr.mxu0 0.0
    %1814 = vmatpush1.msra.mxu0 0.0
    %1815 = vmatprep.subr.mxu0 0.0
    %1816 = vmatpush1.msra.mxu0 0.0
    %1817 = vmatprep.subr.mxu0 0.0
    %1818 = vmatpush1.msra.mxu0 0.0
    %1819 = vmatprep.subr.mxu0 0.0
    %1820 = vmatpush1.msra.mxu0 0.0
    %1821 = vmatprep.subr.mxu0 0.0
    %1822 = vmatpush1.msra.mxu0 0.0
    %1823 = vmatprep.subr.mxu0 0.0
    %1824 = vmatpush1.msra.mxu0 0.0
    %1825 = vmatprep.subr.mxu0 0.0
    %1826 = vmatpush1.msra.mxu0 0.0
    %1827 = vmatprep.subr.mxu0 0.0
    %1828 = vmatpush1.msra.mxu0 0.0
    %1829 = vmatprep.subr.mxu0 0.0
    %1830 = vmatpush1.msra.mxu0 0.0
    %1831 = vmatprep.subr.mxu0 0.0
    %1832 = vmatpush1.msra.mxu0 0.0
    %1833 = vmatprep.subr.mxu0 0.0
    %1834 = vmatpush1.msra.mxu0 0.0
    %1835 = vmatprep.subr.mxu0 0.0
    %1836 = vmatpush1.msra.mxu0 0.0
    %1837 = vmatprep.subr.mxu0 0.0
    %1838 = vmatpush1.msra.mxu0 0.0
    %1839 = vmatprep.subr.mxu0 0.0
    %1840 = vmatpush1.msra.mxu0 0.0
    %1841 = vmatprep.mubr.f32.mxu0 0.0
    %1842 = vmatmul.mubr.f32.gmra.mrb[0].mxu0 %v1775
    %v1843 = vpop.f32.mrb[0].mxu0
    %v1844 = vadd.f32 0.0, %v1843
    %v1845 = vpop.f32.mrb[0].mxu0
    %1846 = vdwg.mxu0
    %v1848 = vsel %vm242, %v1844, 0
    %1850 = vmatprep.subr.mxu0 0.0
    %1851 = vmatpush1.msra.mxu0 %v885
    %1852 = vmatprep.subr.mxu0 0.0
    %1853 = vmatpush1.msra.mxu0 0.0
    %1854 = vmatprep.subr.mxu0 0.0
    %1855 = vmatpush1.msra.mxu0 0.0
    %1856 = vmatprep.subr.mxu0 0.0
    %1857 = vmatpush1.msra.mxu0 0.0
    %1858 = vmatprep.subr.mxu0 0.0
    %1859 = vmatpush1.msra.mxu0 0.0
    %1860 = vmatprep.subr.mxu0 0.0
    %1861 = vmatpush1.msra.mxu0 0.0
    %1862 = vmatprep.subr.mxu0 0.0
    %1863 = vmatpush1.msra.mxu0 0.0
    %1864 = vmatprep.subr.mxu0 0.0
    %1865 = vmatpush1.msra.mxu0 0.0
    %1866 = vmatprep.subr.mxu0 0.0
    %1867 = vmatpush1.msra.mxu0 0.0
    %1868 = vmatprep.subr.mxu0 0.0
    %1869 = vmatpush1.msra.mxu0 0.0
    %1870 = vmatprep.subr.mxu0 0.0
    %1871 = vmatpush1.msra.mxu0 0.0
    %1872 = vmatprep.subr.mxu0 0.0
    %1873 = vmatpush1.msra.mxu0 0.0
    %1874 = vmatprep.subr.mxu0 0.0
    %1875 = vmatpush1.msra.mxu0 0.0
    %1876 = vmatprep.subr.mxu0 0.0
    %1877 = vmatpush1.msra.mxu0 0.0
    %1878 = vmatprep.subr.mxu0 0.0
    %1879 = vmatpush1.msra.mxu0 0.0
    %1880 = vmatprep.subr.mxu0 0.0
    %1881 = vmatpush1.msra.mxu0 0.0
    %1882 = vmatprep.subr.mxu0 0.0
    %1883 = vmatpush1.msra.mxu0 0.0
    %1884 = vmatprep.subr.mxu0 0.0
    %1885 = vmatpush1.msra.mxu0 0.0
    %1886 = vmatprep.subr.mxu0 0.0
    %1887 = vmatpush1.msra.mxu0 0.0
    %1888 = vmatprep.subr.mxu0 0.0
    %1889 = vmatpush1.msra.mxu0 0.0
    %1890 = vmatprep.subr.mxu0 0.0
    %1891 = vmatpush1.msra.mxu0 0.0
    %1892 = vmatprep.subr.mxu0 0.0
    %1893 = vmatpush1.msra.mxu0 0.0
    %1894 = vmatprep.subr.mxu0 0.0
    %1895 = vmatpush1.msra.mxu0 0.0
    %1896 = vmatprep.subr.mxu0 0.0
    %1897 = vmatpush1.msra.mxu0 0.0
    %1898 = vmatprep.subr.mxu0 0.0
    %1899 = vmatpush1.msra.mxu0 0.0
    %1900 = vmatprep.subr.mxu0 0.0
    %1901 = vmatpush1.msra.mxu0 0.0
    %1902 = vmatprep.subr.mxu0 0.0
    %1903 = vmatpush1.msra.mxu0 0.0
    %1904 = vmatprep.subr.mxu0 0.0
    %1905 = vmatpush1.msra.mxu0 0.0
    %1906 = vmatprep.subr.mxu0 0.0
    %1907 = vmatpush1.msra.mxu0 0.0
    %1908 = vmatprep.subr.mxu0 0.0
    %1909 = vmatpush1.msra.mxu0 0.0
    %1910 = vmatprep.subr.mxu0 0.0
    %1911 = vmatpush1.msra.mxu0 0.0
    %1912 = vmatprep.subr.mxu0 0.0
    %1913 = vmatpush1.msra.mxu0 0.0
    %1914 = vmatprep.mubr.f32.mxu0 0.0
    %1915 = vmatmul.mubr.f32.gmra.mrb[0].mxu0 %v1848
    %v1916 = vpop.f32.mrb[0].mxu0
    %v1917 = vadd.f32 0.0, %v1916
    %v1918 = vpop.f32.mrb[0].mxu0
    %1919 = vdwg.mxu0
    %v1920 = vadd.f32 %v1678, %v1917
    %1921 = vrot.lane.b32.xlu0 %v234, 104
    %v1922 = vpop.permute.xlu0 %1921
    %1923 = vrot.lane.b32.xlu0 %v234, 72
    %v1924 = vpop.permute.xlu0 %1923
    %v1925 = vsel %vm242, %v1922, 0
    %v1927 = vsel %vm242, %v1924, 0
    %1929 = vmatprep.subr.mxu0 0.0
    %1930 = vmatpush1.xpose.msra.mxu0 %v1927
    %1931 = vmatprep.subr.mxu0 0.0
    %1932 = vmatpush1.xpose.msra.mxu0 0.0
    %1933 = vmatprep.subr.mxu0 0.0
    %1934 = vmatpush1.xpose.msra.mxu0 0.0
    %1935 = vmatprep.subr.mxu0 0.0
    %1936 = vmatpush1.xpose.msra.mxu0 0.0
    %1937 = vmatprep.subr.mxu0 0.0
    %1938 = vmatpush1.xpose.msra.mxu0 0.0
    %1939 = vmatprep.subr.mxu0 0.0
    %1940 = vmatpush1.xpose.msra.mxu0 0.0
    %1941 = vmatprep.subr.mxu0 0.0
    %1942 = vmatpush1.xpose.msra.mxu0 0.0
    %1943 = vmatprep.subr.mxu0 0.0
    %1944 = vmatpush1.xpose.msra.mxu0 0.0
    %1945 = vmatprep.subr.mxu0 0.0
    %1946 = vmatpush1.xpose.msra.mxu0 0.0
    %1947 = vmatprep.subr.mxu0 0.0
    %1948 = vmatpush1.xpose.msra.mxu0 0.0
    %1949 = vmatprep.subr.mxu0 0.0
    %1950 = vmatpush1.xpose.msra.mxu0 0.0
    %1951 = vmatprep.subr.mxu0 0.0
    %1952 = vmatpush1.xpose.msra.mxu0 0.0
    %1953 = vmatprep.subr.mxu0 0.0
    %1954 = vmatpush1.xpose.msra.mxu0 0.0
    %1955 = vmatprep.subr.mxu0 0.0
    %1956 = vmatpush1.xpose.msra.mxu0 0.0
    %1957 = vmatprep.subr.mxu0 0.0
    %1958 = vmatpush1.xpose.msra.mxu0 0.0
    %1959 = vmatprep.subr.mxu0 0.0
    %1960 = vmatpush1.xpose.msra.mxu0 0.0
    %1961 = vmatprep.subr.mxu0 0.0
    %1962 = vmatpush1.xpose.msra.mxu0 0.0
    %1963 = vmatprep.subr.mxu0 0.0
    %1964 = vmatpush1.xpose.msra.mxu0 0.0
    %1965 = vmatprep.subr.mxu0 0.0
    %1966 = vmatpush1.xpose.msra.mxu0 0.0
    %1967 = vmatprep.subr.mxu0 0.0
    %1968 = vmatpush1.xpose.msra.mxu0 0.0
    %1969 = vmatprep.subr.mxu0 0.0
    %1970 = vmatpush1.xpose.msra.mxu0 0.0
    %1971 = vmatprep.subr.mxu0 0.0
    %1972 = vmatpush1.xpose.msra.mxu0 0.0
    %1973 = vmatprep.subr.mxu0 0.0
    %1974 = vmatpush1.xpose.msra.mxu0 0.0
    %1975 = vmatprep.subr.mxu0 0.0
    %1976 = vmatpush1.xpose.msra.mxu0 0.0
    %1977 = vmatprep.subr.mxu0 0.0
    %1978 = vmatpush1.xpose.msra.mxu0 0.0
    %1979 = vmatprep.subr.mxu0 0.0
    %1980 = vmatpush1.xpose.msra.mxu0 0.0
    %1981 = vmatprep.subr.mxu0 0.0
    %1982 = vmatpush1.xpose.msra.mxu0 0.0
    %1983 = vmatprep.subr.mxu0 0.0
    %1984 = vmatpush1.xpose.msra.mxu0 0.0
    %1985 = vmatprep.subr.mxu0 0.0
    %1986 = vmatpush1.xpose.msra.mxu0 0.0
    %1987 = vmatprep.subr.mxu0 0.0
    %1988 = vmatpush1.xpose.msra.mxu0 0.0
    %1989 = vmatprep.subr.mxu0 0.0
    %1990 = vmatpush1.xpose.msra.mxu0 0.0
    %1991 = vmatprep.subr.mxu0 0.0
    %1992 = vmatpush1.xpose.msra.mxu0 0.0
    %1993 = vmatprep.mubr.f32.mxu0 0.0
    %1994 = vmatmul.mubr.f32.gmra.mrb[0].mxu0 %v1925
    %v1995 = vpop.f32.mrb[0].mxu0
    %v1996 = vadd.f32 0.0, %v1995
    %v1997 = vpop.f32.mrb[0].mxu0
    %1998 = vdwg.mxu0
    %v1999 = vsel %vm1203, -1e+09, %v1996
    %v2000 = vsel %vm242, %v1999, -inf
    %2001 = vmax.xlane.f32.xlu0 %v2000
    %v2002 = vpop.xlane.xlu0 %2001
    %v2003 = vsub.f32 %v1999, %v2002
    %v2004 = vmul.f32 %v2003, 1.442695
    %v2005 = vpow.pop %v2004
    %v2006 = vsel %vm242, %v2005, 0.0
    %2007 = vadd.xlane.f32.xlu0 %v2006
    %v2008 = vpop.xlane.xlu0 %2007
    %v2009 = vrcp.pop %v2008
    %v2010 = vmul.f32 %v2005, %v2009
    %2011 = vrot.lane.b32.xlu0 %v234, 40
    %v2012 = vpop.permute.xlu0 %2011
    %v2015 = vsel %vm242, %v2010, 0
    %2017 = vmatprep.subr.mxu0 0.0
    %2018 = vmatpush1.msra.mxu0 %v2012
    %2019 = vmatprep.subr.mxu0 0.0
    %2020 = vmatpush1.msra.mxu0 0.0
    %2021 = vmatprep.subr.mxu0 0.0
    %2022 = vmatpush1.msra.mxu0 0.0
    %2023 = vmatprep.subr.mxu0 0.0
    %2024 = vmatpush1.msra.mxu0 0.0
    %2025 = vmatprep.subr.mxu0 0.0
    %2026 = vmatpush1.msra.mxu0 0.0
    %2027 = vmatprep.subr.mxu0 0.0
    %2028 = vmatpush1.msra.mxu0 0.0
    %2029 = vmatprep.subr.mxu0 0.0
    %2030 = vmatpush1.msra.mxu0 0.0
    %2031 = vmatprep.subr.mxu0 0.0
    %2032 = vmatpush1.msra.mxu0 0.0
    %2033 = vmatprep.subr.mxu0 0.0
    %2034 = vmatpush1.msra.mxu0 0.0
    %2035 = vmatprep.subr.mxu0 0.0
    %2036 = vmatpush1.msra.mxu0 0.0
    %2037 = vmatprep.subr.mxu0 0.0
    %2038 = vmatpush1.msra.mxu0 0.0
    %2039 = vmatprep.subr.mxu0 0.0
    %2040 = vmatpush1.msra.mxu0 0.0
    %2041 = vmatprep.subr.mxu0 0.0
    %2042 = vmatpush1.msra.mxu0 0.0
    %2043 = vmatprep.subr.mxu0 0.0
    %2044 = vmatpush1.msra.mxu0 0.0
    %2045 = vmatprep.subr.mxu0 0.0
    %2046 = vmatpush1.msra.mxu0 0.0
    %2047 = vmatprep.subr.mxu0 0.0
    %2048 = vmatpush1.msra.mxu0 0.0
    %2049 = vmatprep.subr.mxu0 0.0
    %2050 = vmatpush1.msra.mxu0 0.0
    %2051 = vmatprep.subr.mxu0 0.0
    %2052 = vmatpush1.msra.mxu0 0.0
    %2053 = vmatprep.subr.mxu0 0.0
    %2054 = vmatpush1.msra.mxu0 0.0
    %2055 = vmatprep.subr.mxu0 0.0
    %2056 = vmatpush1.msra.mxu0 0.0
    %2057 = vmatprep.subr.mxu0 0.0
    %2058 = vmatpush1.msra.mxu0 0.0
    %2059 = vmatprep.subr.mxu0 0.0
    %2060 = vmatpush1.msra.mxu0 0.0
    %2061 = vmatprep.subr.mxu0 0.0
    %2062 = vmatpush1.msra.mxu0 0.0
    %2063 = vmatprep.subr.mxu0 0.0
    %2064 = vmatpush1.msra.mxu0 0.0
    %2065 = vmatprep.subr.mxu0 0.0
    %2066 = vmatpush1.msra.mxu0 0.0
    %2067 = vmatprep.subr.mxu0 0.0
    %2068 = vmatpush1.msra.mxu0 0.0
    %2069 = vmatprep.subr.mxu0 0.0
    %2070 = vmatpush1.msra.mxu0 0.0
    %2071 = vmatprep.subr.mxu0 0.0
    %2072 = vmatpush1.msra.mxu0 0.0
    %2073 = vmatprep.subr.mxu0 0.0
    %2074 = vmatpush1.msra.mxu0 0.0
    %2075 = vmatprep.subr.mxu0 0.0
    %2076 = vmatpush1.msra.mxu0 0.0
    %2077 = vmatprep.subr.mxu0 0.0
    %2078 = vmatpush1.msra.mxu0 0.0
    %2079 = vmatprep.subr.mxu0 0.0
    %2080 = vmatpush1.msra.mxu0 0.0
    %2081 = vmatprep.mubr.f32.mxu0 0.0
    %2082 = vmatmul.mubr.f32.gmra.mrb[0].mxu0 %v2015
    %v2083 = vpop.f32.mrb[0].mxu0
    %v2084 = vadd.f32 0.0, %v2083
    %v2085 = vpop.f32.mrb[0].mxu0
    %2086 = vdwg.mxu0
    %v2088 = vsel %vm242, %v2084, 0
    %2090 = vmatprep.subr.mxu0 0.0
    %2091 = vmatpush1.msra.mxu0 %v1126
    %2092 = vmatprep.subr.mxu0 0.0
    %2093 = vmatpush1.msra.mxu0 0.0
    %2094 = vmatprep.subr.mxu0 0.0
    %2095 = vmatpush1.msra.mxu0 0.0
    %2096 = vmatprep.subr.mxu0 0.0
    %2097 = vmatpush1.msra.mxu0 0.0
    %2098 = vmatprep.subr.mxu0 0.0
    %2099 = vmatpush1.msra.mxu0 0.0
    %2100 = vmatprep.subr.mxu0 0.0
    %2101 = vmatpush1.msra.mxu0 0.0
    %2102 = vmatprep.subr.mxu0 0.0
    %2103 = vmatpush1.msra.mxu0 0.0
    %2104 = vmatprep.subr.mxu0 0.0
    %2105 = vmatpush1.msra.mxu0 0.0
    %2106 = vmatprep.subr.mxu0 0.0
    %2107 = vmatpush1.msra.mxu0 0.0
    %2108 = vmatprep.subr.mxu0 0.0
    %2109 = vmatpush1.msra.mxu0 0.0
    %2110 = vmatprep.subr.mxu0 0.0
    %2111 = vmatpush1.msra.mxu0 0.0
    %2112 = vmatprep.subr.mxu0 0.0
    %2113 = vmatpush1.msra.mxu0 0.0
    %2114 = vmatprep.subr.mxu0 0.0
    %2115 = vmatpush1.msra.mxu0 0.0
    %2116 = vmatprep.subr.mxu0 0.0
    %2117 = vmatpush1.msra.mxu0 0.0
    %2118 = vmatprep.subr.mxu0 0.0
    %2119 = vmatpush1.msra.mxu0 0.0
    %2120 = vmatprep.subr.mxu0 0.0
    %2121 = vmatpush1.msra.mxu0 0.0
    %2122 = vmatprep.subr.mxu0 0.0
    %2123 = vmatpush1.msra.mxu0 0.0
    %2124 = vmatprep.subr.mxu0 0.0
    %2125 = vmatpush1.msra.mxu0 0.0
    %2126 = vmatprep.subr.mxu0 0.0
    %2127 = vmatpush1.msra.mxu0 0.0
    %2128 = vmatprep.subr.mxu0 0.0
    %2129 = vmatpush1.msra.mxu0 0.0
    %2130 = vmatprep.subr.mxu0 0.0
    %2131 = vmatpush1.msra.mxu0 0.0
    %2132 = vmatprep.subr.mxu0 0.0
    %2133 = vmatpush1.msra.mxu0 0.0
    %2134 = vmatprep.subr.mxu0 0.0
    %2135 = vmatpush1.msra.mxu0 0.0
    %2136 = vmatprep.subr.mxu0 0.0
    %2137 = vmatpush1.msra.mxu0 0.0
    %2138 = vmatprep.subr.mxu0 0.0
    %2139 = vmatpush1.msra.mxu0 0.0
    %2140 = vmatprep.subr.mxu0 0.0
    %2141 = vmatpush1.msra.mxu0 0.0
    %2142 = vmatprep.subr.mxu0 0.0
    %2143 = vmatpush1.msra.mxu0 0.0
    %2144 = vmatprep.subr.mxu0 0.0
    %2145 = vmatpush1.msra.mxu0 0.0
    %2146 = vmatprep.subr.mxu0 0.0
    %2147 = vmatpush1.msra.mxu0 0.0
    %2148 = vmatprep.subr.mxu0 0.0
    %2149 = vmatpush1.msra.mxu0 0.0
    %2150 = vmatprep.subr.mxu0 0.0
    %2151 = vmatpush1.msra.mxu0 0.0
    %2152 = vmatprep.subr.mxu0 0.0
    %2153 = vmatpush1.msra.mxu0 0.0
    %2154 = vmatprep.mubr.f32.mxu0 0.0
    %2155 = vmatmul.mubr.f32.gmra.mrb[0].mxu0 %v2088
    %v2156 = vpop.f32.mrb[0].mxu0
    %v2157 = vadd.f32 0.0, %v2156
    %v2158 = vpop.f32.mrb[0].mxu0
    %2159 = vdwg.mxu0
    %v2160 = vadd.f32 %v1920, %v2157
    %v2161 = vld [vmem:[%s6] sm:$0x1]
    %v2163 = vlaneseq
    %v2164 = vshrl.u32 %v2163, 7
    %v2165 = vsub.s32 0, %v2164
    %v2166 = vrot.slane %v2161, %v2165
    %v2168 = vadd.f32 %v1200, %v2166
    %v2169 = vadd.f32 %v2160, %v2166
    %v2170 = vadd.f32 %v93, %v2168
    %v2171 = vadd.f32 %v95, %v2169
    %v2172 = vsel %vm96, %v2170, 0.0
    %2173 = vadd.xlane.f32.xlu0 %v2172
    %v2174 = vpop.xlane.xlu0 %2173
    %v2175 = vsel %vm96, %v2171, 0.0
    %2176 = vadd.xlane.f32.xlu0 %v2175
    %v2177 = vpop.xlane.xlu0 %2176
    %v2178 = vmul.f32 %v2174, %v103
    %v2179 = vmul.f32 %v2177, %v103
    %v2180 = vsub.f32 %v2170, %v2178
    %v2181 = vsub.f32 %v2171, %v2179
    %v2182 = vmul.f32 %v2180, %v2180
    %v2183 = vmul.f32 %v2181, %v2181
    %v2184 = vsel %vm96, %v2182, 0.0
    %2185 = vadd.xlane.f32.xlu0 %v2184
    %v2186 = vpop.xlane.xlu0 %2185
    %v2187 = vsel %vm96, %v2183, 0.0
    %2188 = vadd.xlane.f32.xlu0 %v2187
    %v2189 = vpop.xlane.xlu0 %2188
    %v2190 = vmul.f32 %v2186, %v116
    %v2191 = vmul.f32 %v2189, %v116
    %v2192 = vrsqrt.pop %v2190
    %v2193 = vmul.f32 %v2190, %v2192
    %vm2194 = vcmp.eq.f32.partialorder %v2190, inf
    %v2195 = vsel %vm2194, %v2190, %v2193
    %vm2196 = vcmp.eq.f32.partialorder %v2190, 0.0
    %v2197 = vand.u32 %v2190, 2147483648
    %v2198 = vsel %vm2196, %v2197, %v2195
    %v2199 = vrsqrt.pop %v2191
    %v2200 = vmul.f32 %v2191, %v2199
    %vm2201 = vcmp.eq.f32.partialorder %v2191, inf
    %v2202 = vsel %vm2201, %v2191, %v2200
    %vm2203 = vcmp.eq.f32.partialorder %v2191, 0.0
    %v2204 = vand.u32 %v2191, 2147483648
    %v2205 = vsel %vm2203, %v2204, %v2202
    %v2206 = vstv %s91
    %v2207 = vmul.f32 %v2206, %v2180
    %v2208 = vmul.f32 %v2206, %v2181
    %v2209 = vadd.f32 %v2198, 1e-06
    %v2210 = vadd.f32 %v2205, 1e-06
    %v2211 = vrcp.pop %v2209
    %v2212 = vmul.f32 %v2207, %v2211
    %v2213 = vrcp.pop %v2210
    %v2214 = vmul.f32 %v2208, %v2213
    %v2215 = vstv %s92
    %v2216 = vadd.f32 %v2212, %v2215
    %v2217 = vadd.f32 %v2214, %v2215
    %v2218 = vld [vmem:[%s7] sm:$0xff]
    %v2219 = vld [vmem:[%s7 + $0x8] sm:$0xff]
    %v2220 = vld [vmem:[%s7 + $0x10] sm:$0xff]
    %v2221 = vld [vmem:[%s7 + $0x18] sm:$0xff]
    %v2222 = vld [vmem:[#allocation9] sm:$0x1]
    %v2224 = vlaneseq
    %v2225 = vshrl.u32 %v2224, 7
    %v2226 = vsub.s32 0, %v2225
    %v2227 = vrot.slane %v2222, %v2226
    %v2230 = vsel %vm96, %v2216, 0
    %v2233 = vsel %vm96, %v2217, 0
    %2235 = vmatprep.subr.mxu0 0.0
    %2236 = vmatpush1.msra.mxu0 %v2218
    %2237 = vmatprep.subr.mxu0 0.0
    %2238 = vmatpush1.msra.mxu0 %v2219
    %2239 = vmatprep.subr.mxu0 0.0
    %2240 = vmatpush1.msra.mxu0 %v2220
    %2241 = vmatprep.subr.mxu0 0.0
    %2242 = vmatpush1.msra.mxu0 %v2221
    %2243 = vmatprep.subr.mxu0 0.0
    %2244 = vmatpush1.msra.mxu0 0.0
    %2245 = vmatprep.subr.mxu0 0.0
    %2246 = vmatpush1.msra.mxu0 0.0
    %2247 = vmatprep.subr.mxu0 0.0
    %2248 = vmatpush1.msra.mxu0 0.0
    %2249 = vmatprep.subr.mxu0 0.0
    %2250 = vmatpush1.msra.mxu0 0.0
    %2251 = vmatprep.subr.mxu0 0.0
    %2252 = vmatpush1.msra.mxu0 0.0
    %2253 = vmatprep.subr.mxu0 0.0
    %2254 = vmatpush1.msra.mxu0 0.0
    %2255 = vmatprep.subr.mxu0 0.0
    %2256 = vmatpush1.msra.mxu0 0.0
    %2257 = vmatprep.subr.mxu0 0.0
    %2258 = vmatpush1.msra.mxu0 0.0
    %2259 = vmatprep.subr.mxu0 0.0
    %2260 = vmatpush1.msra.mxu0 0.0
    %2261 = vmatprep.subr.mxu0 0.0
    %2262 = vmatpush1.msra.mxu0 0.0
    %2263 = vmatprep.subr.mxu0 0.0
    %2264 = vmatpush1.msra.mxu0 0.0
    %2265 = vmatprep.subr.mxu0 0.0
    %2266 = vmatpush1.msra.mxu0 0.0
    %2267 = vmatprep.subr.mxu0 0.0
    %2268 = vmatpush1.msra.mxu0 0.0
    %2269 = vmatprep.subr.mxu0 0.0
    %2270 = vmatpush1.msra.mxu0 0.0
    %2271 = vmatprep.subr.mxu0 0.0
    %2272 = vmatpush1.msra.mxu0 0.0
    %2273 = vmatprep.subr.mxu0 0.0
    %2274 = vmatpush1.msra.mxu0 0.0
    %2275 = vmatprep.subr.mxu0 0.0
    %2276 = vmatpush1.msra.mxu0 0.0
    %2277 = vmatprep.subr.mxu0 0.0
    %2278 = vmatpush1.msra.mxu0 0.0
    %2279 = vmatprep.subr.mxu0 0.0
    %2280 = vmatpush1.msra.mxu0 0.0
    %2281 = vmatprep.subr.mxu0 0.0
    %2282 = vmatpush1.msra.mxu0 0.0
    %2283 = vmatprep.subr.mxu0 0.0
    %2284 = vmatpush1.msra.mxu0 0.0
    %2285 = vmatprep.subr.mxu0 0.0
    %2286 = vmatpush1.msra.mxu0 0.0
    %2287 = vmatprep.subr.mxu0 0.0
    %2288 = vmatpush1.msra.mxu0 0.0
    %2289 = vmatprep.subr.mxu0 0.0
    %2290 = vmatpush1.msra.mxu0 0.0
    %2291 = vmatprep.subr.mxu0 0.0
    %2292 = vmatpush1.msra.mxu0 0.0
    %2293 = vmatprep.subr.mxu0 0.0
    %2294 = vmatpush1.msra.mxu0 0.0
    %2295 = vmatprep.subr.mxu0 0.0
    %2296 = vmatpush1.msra.mxu0 0.0
    %2297 = vmatprep.subr.mxu0 0.0
    %2298 = vmatpush1.msra.mxu0 0.0
    %2299 = vmatprep.mubr.f32.mxu0 0.0
    %2300 = vmatmul.mubr.f32.gmra.mrb[0].mxu0 %v2230
    %v2301 = vpop.f32.mrb[0].mxu0
    %v2302 = vadd.f32 %v2227, %v2301
    %v2303 = vpop.f32.mrb[0].mxu0
    %2304 = vmatprep.mubr.f32.mxu0 0.0
    %2305 = vmatmul.mubr.f32.gmra.mrb[0].mxu0 %v2233
    %v2306 = vpop.f32.mrb[0].mxu0
    %v2307 = vadd.f32 %v2227, %v2306
    %v2308 = vpop.f32.mrb[0].mxu0
    %2309 = vdwg.mxu0
    %v2310 = vmax.f32 %v2302, 0.0
    %v2311 = vmax.f32 %v2307, 0.0
    %v2312 = vld [vmem:[%s9] sm:$0xff]
    %v2313 = vld [vmem:[%s9 + $0x8] sm:$0xff]
    %v2314 = vld [vmem:[%s9 + $0x10] sm:$0xff]
    %v2315 = vld [vmem:[%s9 + $0x18] sm:$0xff]
    %v2316 = vld [vmem:[%s9 + $0x20] sm:$0xff]
    %v2317 = vld [vmem:[%s9 + $0x28] sm:$0xff]
    %v2318 = vld [vmem:[%s9 + $0x30] sm:$0xff]
    %v2319 = vld [vmem:[%s9 + $0x38] sm:$0xff]
    %v2320 = vld [vmem:[%s10] sm:$0x1]
    %v2322 = vlaneseq
    %v2323 = vshrl.u32 %v2322, 7
    %v2324 = vsub.s32 0, %v2323
    %v2325 = vrot.slane %v2320, %v2324
    %vm2327 = vcmask 523264
    %v2329 = vsel %vm2327, %v2310, 0
    %v2332 = vsel %vm2327, %v2311, 0
    %2334 = vmatprep.subr.mxu0 0.0
    %2335 = vmatpush1.msra.mxu0 %v2312
    %2336 = vmatprep.subr.mxu0 0.0
    %2337 = vmatpush1.msra.mxu0 %v2313
    %2338 = vmatprep.subr.mxu0 0.0
    %2339 = vmatpush1.msra.mxu0 %v2314
    %2340 = vmatprep.subr.mxu0 0.0
    %2341 = vmatpush1.msra.mxu0 %v2315
    %2342 = vmatprep.subr.mxu0 0.0
    %2343 = vmatpush1.msra.mxu0 %v2316
    %2344 = vmatprep.subr.mxu0 0.0
    %2345 = vmatpush1.msra.mxu0 %v2317
    %2346 = vmatprep.subr.mxu0 0.0
    %2347 = vmatpush1.msra.mxu0 %v2318
    %2348 = vmatprep.subr.mxu0 0.0
    %2349 = vmatpush1.msra.mxu0 %v2319
    %2350 = vmatprep.subr.mxu0 0.0
    %2351 = vmatpush1.msra.mxu0 0.0
    %2352 = vmatprep.subr.mxu0 0.0
    %2353 = vmatpush1.msra.mxu0 0.0
    %2354 = vmatprep.subr.mxu0 0.0
    %2355 = vmatpush1.msra.mxu0 0.0
    %2356 = vmatprep.subr.mxu0 0.0
    %2357 = vmatpush1.msra.mxu0 0.0
    %2358 = vmatprep.subr.mxu0 0.0
    %2359 = vmatpush1.msra.mxu0 0.0
    %2360 = vmatprep.subr.mxu0 0.0
    %2361 = vmatpush1.msra.mxu0 0.0
    %2362 = vmatprep.subr.mxu0 0.0
    %2363 = vmatpush1.msra.mxu0 0.0
    %2364 = vmatprep.subr.mxu0 0.0
    %2365 = vmatpush1.msra.mxu0 0.0
    %2366 = vmatprep.subr.mxu0 0.0
    %2367 = vmatpush1.msra.mxu0 0.0
    %2368 = vmatprep.subr.mxu0 0.0
    %2369 = vmatpush1.msra.mxu0 0.0
    %2370 = vmatprep.subr.mxu0 0.0
    %2371 = vmatpush1.msra.mxu0 0.0
    %2372 = vmatprep.subr.mxu0 0.0
    %2373 = vmatpush1.msra.mxu0 0.0
    %2374 = vmatprep.subr.mxu0 0.0
    %2375 = vmatpush1.msra.mxu0 0.0
    %2376 = vmatprep.subr.mxu0 0.0
    %2377 = vmatpush1.msra.mxu0 0.0
    %2378 = vmatprep.subr.mxu0 0.0
    %2379 = vmatpush1.msra.mxu0 0.0
    %2380 = vmatprep.subr.mxu0 0.0
    %2381 = vmatpush1.msra.mxu0 0.0
    %2382 = vmatprep.subr.mxu0 0.0
    %2383 = vmatpush1.msra.mxu0 0.0
    %2384 = vmatprep.subr.mxu0 0.0
    %2385 = vmatpush1.msra.mxu0 0.0
    %2386 = vmatprep.subr.mxu0 0.0
    %2387 = vmatpush1.msra.mxu0 0.0
    %2388 = vmatprep.subr.mxu0 0.0
    %2389 = vmatpush1.msra.mxu0 0.0
    %2390 = vmatprep.subr.mxu0 0.0
    %2391 = vmatpush1.msra.mxu0 0.0
    %2392 = vmatprep.subr.mxu0 0.0
    %2393 = vmatpush1.msra.mxu0 0.0
    %2394 = vmatprep.subr.mxu0 0.0
    %2395 = vmatpush1.msra.mxu0 0.0
    %2396 = vmatprep.subr.mxu0 0.0
    %2397 = vmatpush1.msra.mxu0 0.0
    %2398 = vmatprep.mubr.f32.mxu0 0.0
    %2399 = vmatmul.mubr.f32.gmra.mrb[0].mxu0 %v2329
    %v2400 = vpop.f32.mrb[0].mxu0
    %v2401 = vadd.f32 %v2325, %v2400
    %v2402 = vpop.f32.mrb[0].mxu0
    %2403 = vmatprep.mubr.f32.mxu0 0.0
    %2404 = vmatmul.mubr.f32.gmra.mrb[0].mxu0 %v2332
    %v2405 = vpop.f32.mrb[0].mxu0
    %v2406 = vadd.f32 %v2325, %v2405
    %v2407 = vpop.f32.mrb[0].mxu0
    %2408 = vdwg.mxu0
    %v2409 = vadd.f32 %v2170, %v2401
    %v2410 = vadd.f32 %v2171, %v2406
    %2411 = vst.msk [vmem:[#allocation10] sm:$0xff] %vm96, %v2409
    %s2412 = scalar_lea.vmem [#allocation10], 8
    %2413 = vst.msk [vmem:[%s2412] sm:$0xff] %vm96, %v2410
    // Predicated region
    $region62: #{tpu_custom_call.1} parent=1 // pred_check
      _
    $region63: #{tpu_custom_call.1} parent=1 // pred_check_branch
      %2415 = sbr.rel (0) target = $region65
    $region64: #{tpu_custom_call.1} parent=1 // pred_region
      %s2417 = ssub.s32 256, 256
      %2418 = vsyncadd [#allocation4], %s2417
      %s2419 = sshll.u32 [#allocation10], 4
      %s2420 = int_to_ptr.vmem [resolvable:$true] %s2419
      %2425 = dma.vmem_to_hbm [thread:$0]  %s2420, 256, %s11, [#allocation4], 128, 128, 8
    $region65: #{tpu_custom_call.1} parent=1 // pred_fallthru
      _
    // Predicated region
    $region66: #{tpu_custom_call.1} parent=1 // pred_check
      _
    $region67: #{tpu_custom_call.1} parent=1 // pred_check_branch
      %2427 = sbr.rel (0) target = $region69
    $region68: #{tpu_custom_call.1} parent=1 // pred_region
      %2428 = dma.done [#allocation4], 256
    $region69: #{tpu_custom_call.1} parent=1 // pred_fallthru
      _
    %2429 = vsyncpa [#allocation3], 1
    %2430 = vsyncpa [#allocation8], 1
    %2431 = vsyncpa [#allocation4], 1
    %2432 = vsyncpa [#allocation5], 1

</llo_original>
